<compile_context>
chip_gen: v7x
topology: tpu7x:2x2x1
jax: 0.10.0
libtpu: 0.0.40
codegen_flags: <defaults>
</compile_context>

<pallas_src>
import functools
import math

import jax
import jax.numpy as jnp
from jax.experimental import pallas as pl
from jax.experimental.pallas import tpu as pltpu


def _bert_self_attn_kernel(x_ref, wqkv_ref, bqkv_ref, mask_ref, out_ref,
                           *, head_block, head_dim):
    """One (batch, head-block) tile of BertSelfAttention.

    x_ref    : (1, S, D)          bf16 hidden states (resident across inner hb axis)
    wqkv_ref : (Hb, D, 3*HB*Dh)   bf16 fused [Q|K|V] weights, fully resident in VMEM
    bqkv_ref : (Hb, 1, 3*HB*Dh)   f32 fused [Q|K|V] bias, fully resident
    mask_ref : (1, 1, S)          f32 additive attention mask (0 keep / -1e9 masked)
    out_ref  : (1, S, HB*Dh)      context slab, already in context_layer layout
    """
    hb = pl.program_id(1)
    hbd = head_block * head_dim

    x = x_ref[0]                                      # (S, D)       bf16
    w = wqkv_ref[hb]                                  # (D, 3*HB*Dh) bf16
    b = bqkv_ref[hb]                                  # (1, 3*HB*Dh) f32
    mask = mask_ref[0]                                # (1, S)       f32

    # Fused Q/K/V projection for every head in this block: one bf16 MXU matmul
    # with f32 accumulation.  The 1/sqrt(Dh) scale is already folded into the
    # Q columns of w / b by the wrapper.
    qkv = jnp.dot(x, w, preferred_element_type=jnp.float32) + b   # (S, 3*HB*Dh) f32

    ctx_blocks = []
    for h in range(head_block):                       # small static unrolled loop
        q = qkv[:, h * head_dim:(h + 1) * head_dim]                       # pre-scaled Q
        k = qkv[:, hbd + h * head_dim:hbd + (h + 1) * head_dim]
        v = qkv[:, 2 * hbd + h * head_dim:2 * hbd + (h + 1) * head_dim]

        # scores = Qs @ K^T + mask — bf16 MXU operands, f32 accumulation, no
        # transpose copy (contraction over the head dim of both operands).
        scores = jax.lax.dot_general(
            q.astype(jnp.bfloat16), k.astype(jnp.bfloat16),
            (((1,), (1,)), ((), ())),
            preferred_element_type=jnp.float32)
        scores = scores + mask                        # (S, S) + (1, S) broadcast

        # Numerically-stable softmax; statistics kept in f32 (v5e has no bf16
        # VPU/EUP).  Normalization is deferred until after the PV matmul.
        # Note: fully-masked rows degrade to uniform attention (same as torch).
        m = jnp.max(scores, axis=-1, keepdims=True)
        p = jnp.exp(scores - m)                       # unnormalized probs, f32
        denom = jnp.sum(p, axis=-1, keepdims=True)
        # TODO(synk): attention_probs dropout omitted (inference path / p = 0).

        # context = (p @ V) * (1/denom) — bf16 MXU matmul, reciprocal on the EUP.
        ctx_un = jnp.dot(p.astype(jnp.bfloat16), v.astype(jnp.bfloat16),
                         preferred_element_type=jnp.float32)      # (S, Dh) f32
        ctx = ctx_un * pl.reciprocal(denom, approx=True)
        ctx_blocks.append(ctx)

    # Single lane-dense store of the whole (S, HB*Dh) context slab.
    out_ref[0] = jnp.concatenate(ctx_blocks, axis=-1).astype(out_ref.dtype)


def _choose_head_block(num_heads, head_dim):
    """Largest HB <= 4 dividing H whose output slab HB*Dh is lane-dense (%128)."""
    for hb in (4, 3, 2, 1):
        if num_heads % hb == 0 and (hb * head_dim) % 128 == 0:
            return hb
    return num_heads


def bert_self_attention_forward(hidden_states, params, attention_mask, num_heads,
                                head_block=None):
    """Fused BertSelfAttention forward.

    hidden_states : [B, S, D] float32
    params        : dict with wq/wk/wv [D, D] (y = x @ W + b layout) and bq/bk/bv [D]
    attention_mask: [B, S] additive float mask (0 keep, -1e9 masked)
    returns       : context_layer [B, S, D]  (same dtype as hidden_states)
    """
    B, S, D = hidden_states.shape
    H = num_heads
    Dh = D // H
    scale = 1.0 / math.sqrt(Dh)
    if head_block is None:
        head_block = _choose_head_block(H, Dh)
    HB = head_block
    assert H % HB == 0, "head_block must divide num_heads"
    Hb = H // HB
    out_dtype = hidden_states.dtype

    # Fused per-head-block QKV weights (Hb, D, 3*HB*Dh): last-dim layout is
    # [Q heads of block | K heads of block | V heads of block].  The 1/sqrt(Dh)
    # scale is folded into the Q columns once here (scaling weights is far
    # cheaper than scaling the S x S score tile in-kernel).
    def per_block_w(w, s):                     # (D, H*Dh) -> (Hb, D, HB*Dh)
        return (w.astype(jnp.float32) * s).reshape(D, Hb, HB * Dh).transpose(1, 0, 2)

    def per_block_b(bvec, s):                  # (H*Dh,) -> (Hb, 1, HB*Dh)
        return (bvec.astype(jnp.float32) * s).reshape(Hb, 1, HB * Dh)

    wqkv = jnp.concatenate(
        [per_block_w(params["wq"], scale),
         per_block_w(params["wk"], 1.0),
         per_block_w(params["wv"], 1.0)], axis=-1).astype(jnp.bfloat16)
    bqkv = jnp.concatenate(
        [per_block_b(params["bq"], scale),
         per_block_b(params["bk"], 1.0),
         per_block_b(params["bv"], 1.0)], axis=-1)    # (Hb, 1, 3*HB*Dh) f32

    x_bf16 = hidden_states.astype(jnp.bfloat16)
    mask3 = attention_mask.reshape(B, 1, S).astype(jnp.float32)

    kernel = functools.partial(_bert_self_attn_kernel,
                               head_block=HB, head_dim=Dh)

    x_spec = pl.BlockSpec((1, S, D), lambda b, hb: (b, 0, 0))            # per batch
    # Full-array blocks with constant index_map -> weights/bias DMA'd once and
    # kept resident in VMEM for the whole grid (no B*H re-fetch).
    w_spec = pl.BlockSpec((Hb, D, 3 * HB * Dh), lambda b, hb: (0, 0, 0))
    b_spec = pl.BlockSpec((Hb, 1, 3 * HB * Dh), lambda b, hb: (0, 0, 0))
    m_spec = pl.BlockSpec((1, 1, S), lambda b, hb: (b, 0, 0))
    # Output written directly in context_layer layout: block covers the HB*Dh
    # columns of this head block -> no post-kernel transpose/reshape pass.
    o_spec = pl.BlockSpec((1, S, HB * Dh), lambda b, hb: (b, 0, hb))

    out = pl.pallas_call(
        kernel,
        out_shape=jax.ShapeDtypeStruct((B, S, H * Dh), out_dtype),
        grid_spec=pltpu.PrefetchScalarGridSpec(
            num_scalar_prefetch=0,
            grid=(B, Hb),
            in_specs=[x_spec, w_spec, b_spec, m_spec],
            out_specs=o_spec,
        ),
        compiler_params=pltpu.CompilerParams(
            dimension_semantics=("parallel", "parallel"),
            vmem_limit_bytes=32 * 1024 * 1024),
    )(x_bf16, wqkv, bqkv, mask3)

    return out   # already context_layer layout [B, S, H*Dh]


def _reference_attention(x, params, attention_mask, num_heads):
    """Pure-JAX f32 reference mirroring the PyTorch module (default path, eval mode)."""
    B, S, D = x.shape
    H = num_heads
    Dh = D // H
    q = (x @ params["wq"] + params["bq"]).reshape(B, S, H, Dh).transpose(0, 2, 1, 3)
    k = (x @ params["wk"] + params["bk"]).reshape(B, S, H, Dh).transpose(0, 2, 1, 3)
    v = (x @ params["wv"] + params["bv"]).reshape(B, S, H, Dh).transpose(0, 2, 1, 3)
    scores = jnp.einsum("bhqd,bhkd->bhqk", q, k) / math.sqrt(Dh)
    scores = scores + attention_mask[:, None, None, :]
    probs = jax.nn.softmax(scores, axis=-1)
    ctx = jnp.einsum("bhqk,bhkd->bhqd", probs, v)
    return ctx.transpose(0, 2, 1, 3).reshape(B, S, H * Dh)


if __name__ == "__main__":
    # Small but TPU-aligned shapes: batch=2, seq=128, hidden=256, heads=2 (d_head=128).
    B, S, D, H = 2, 128, 256, 2

    key = jax.random.PRNGKey(0)
    k_x, k_wq, k_wk, k_wv, k_bq, k_bk, k_bv = jax.random.split(key, 7)

    w_scale = 1.0 / math.sqrt(D)
    hidden_states = jax.random.normal(k_x, (B, S, D), dtype=jnp.float32)
    params = {
        "wq": jax.random.normal(k_wq, (D, D), dtype=jnp.float32) * w_scale,
        "wk": jax.random.normal(k_wk, (D, D), dtype=jnp.float32) * w_scale,
        "wv": jax.random.normal(k_wv, (D, D), dtype=jnp.float32) * w_scale,
        "bq": jax.random.normal(k_bq, (D,), dtype=jnp.float32) * 0.02,
        "bk": jax.random.normal(k_bk, (D,), dtype=jnp.float32) * 0.02,
        "bv": jax.random.normal(k_bv, (D,), dtype=jnp.float32) * 0.02,
    }

    # Additive attention mask: batch 0 fully visible, batch 1 has the last 32 keys masked.
    lengths = jnp.array([S, S - 32], dtype=jnp.int32)
    pos = jnp.arange(S, dtype=jnp.int32)[None, :]
    attention_mask = jnp.where(pos < lengths[:, None], 0.0, -1e9).astype(jnp.float32)

    out = bert_self_attention_forward(hidden_states, params, attention_mask, H)
    out = jax.block_until_ready(out)

    ref = _reference_attention(hidden_states, params, attention_mask, H)
    assert out.shape == (B, S, D)
    assert out.dtype == hidden_states.dtype
    max_err = float(jnp.max(jnp.abs(out - ref)))
    mean_err = float(jnp.mean(jnp.abs(out - ref)))
    # bf16 MXU operands with f32 accumulation: tolerance relaxed vs the pure-f32 path.
    assert max_err < 5e-2, f"max abs error {max_err}"
    assert mean_err < 1e-2, f"mean abs error {mean_err}"

    print("KERNEL_OK")
</pallas_src>

<mosaic_0001>
module attributes {stable_mosaic.version = 11 : i64} {
  func.func @_bert_self_attn_kernel(%arg0: i32, %arg1: i32, %arg2: memref<1x128x256xbf16, #tpu.memory_space<vmem>>, %arg3: memref<1x256x768xbf16, #tpu.memory_space<vmem>>, %arg4: memref<1x1x768xf32, #tpu.memory_space<vmem>>, %arg5: memref<1x1x128xf32, #tpu.memory_space<vmem>>, %arg6: memref<1x128x256xf32, #tpu.memory_space<vmem>>) attributes {dimension_semantics = [#tpu.dimension_semantics<parallel>, #tpu.dimension_semantics<parallel>], iteration_bounds = array<i64: 2, 1>, scalar_prefetch = 0 : i64, scratch_operands = 0 : i64, tpu.core_type = #tpu.core_type<tc>, window_params = [{transform_indices = @transform_0, window_bounds = array<i64: 1, 128, 256>}, {pipeline_mode = #tpu.pipeline_mode<synchronous>, transform_indices = @transform_1, window_bounds = array<i64: 1, 256, 768>}, {pipeline_mode = #tpu.pipeline_mode<synchronous>, transform_indices = @transform_2, window_bounds = array<i64: 1, 1, 768>}, {transform_indices = @transform_3, window_bounds = array<i64: 1, 1, 128>}, {transform_indices = @transform_4, window_bounds = array<i64: 1, 128, 256>}]} {
    %c0 = arith.constant 0 : index
    %c0_0 = arith.constant 0 : index
    %c0_1 = arith.constant 0 : index
    %0 = vector.load %arg2[%c0, %c0_0, %c0_1] : memref<1x128x256xbf16, #tpu.memory_space<vmem>>, vector<1x128x256xbf16>
    %1 = vector.shape_cast %0 : vector<1x128x256xbf16> to vector<128x256xbf16>
    %2 = arith.index_cast %arg1 : i32 to index
    %c0_2 = arith.constant 0 : index
    %c0_3 = arith.constant 0 : index
    %3 = vector.load %arg3[%2, %c0_2, %c0_3] : memref<1x256x768xbf16, #tpu.memory_space<vmem>>, vector<1x256x768xbf16>
    %4 = vector.shape_cast %3 : vector<1x256x768xbf16> to vector<256x768xbf16>
    %5 = arith.index_cast %arg1 : i32 to index
    %c0_4 = arith.constant 0 : index
    %c0_5 = arith.constant 0 : index
    %6 = vector.load %arg4[%5, %c0_4, %c0_5] : memref<1x1x768xf32, #tpu.memory_space<vmem>>, vector<1x1x768xf32>
    %7 = vector.shape_cast %6 : vector<1x1x768xf32> to vector<1x768xf32>
    %c0_6 = arith.constant 0 : index
    %c0_7 = arith.constant 0 : index
    %c0_8 = arith.constant 0 : index
    %8 = vector.load %arg5[%c0_6, %c0_7, %c0_8] : memref<1x1x128xf32, #tpu.memory_space<vmem>>, vector<1x1x128xf32>
    %9 = vector.shape_cast %8 : vector<1x1x128xf32> to vector<1x128xf32>
    %cst = arith.constant dense<0.000000e+00> : vector<128x768xf32>
    %10 = tpu.matmul %1, %4, %cst {dimension_numbers = #tpu.dot_dimension_numbers<[1], [0], [0], [1], [0, 0, 1, 1], [], []>} : vector<128x256xbf16>, vector<256x768xbf16>, vector<128x768xf32> -> vector<128x768xf32>
    %11 = vector.broadcast %7 : vector<1x768xf32> to vector<128x768xf32>
    %12 = arith.addf %10, %11 : vector<128x768xf32>
    %13 = vector.extract_strided_slice %12 {offsets = [0, 0], sizes = [128, 128], strides = [1, 1]} : vector<128x768xf32> to vector<128x128xf32>
    %14 = vector.extract_strided_slice %12 {offsets = [0, 256], sizes = [128, 128], strides = [1, 1]} : vector<128x768xf32> to vector<128x128xf32>
    %15 = vector.extract_strided_slice %12 {offsets = [0, 512], sizes = [128, 128], strides = [1, 1]} : vector<128x768xf32> to vector<128x128xf32>
    %16 = arith.truncf %13 : vector<128x128xf32> to vector<128x128xbf16>
    %17 = arith.truncf %14 : vector<128x128xf32> to vector<128x128xbf16>
    %cst_9 = arith.constant dense<0.000000e+00> : vector<128x128xf32>
    %18 = tpu.matmul %16, %17, %cst_9 {dimension_numbers = #tpu.dot_dimension_numbers<[1], [1], [0], [0], [0, 0, 1, 0], [], []>} : vector<128x128xbf16>, vector<128x128xbf16>, vector<128x128xf32> -> vector<128x128xf32>
    %19 = vector.broadcast %9 : vector<1x128xf32> to vector<128x128xf32>
    %20 = arith.addf %18, %19 : vector<128x128xf32>
    %cst_10 = arith.constant dense<0xFF800000> : vector<128xf32>
    %21 = vector.multi_reduction <maximumf>, %20, %cst_10 [1] : vector<128x128xf32> to vector<128xf32>
    %22 = vector.shape_cast %21 : vector<128xf32> to vector<128x1xf32>
    %23 = vector.broadcast %22 : vector<128x1xf32> to vector<128x128xf32>
    %24 = arith.subf %20, %23 : vector<128x128xf32>
    %25 = math.exp %24 : vector<128x128xf32>
    %cst_11 = arith.constant dense<0.000000e+00> : vector<128xf32>
    %26 = vector.multi_reduction <add>, %25, %cst_11 [1] : vector<128x128xf32> to vector<128xf32>
    %27 = vector.shape_cast %26 : vector<128xf32> to vector<128x1xf32>
    %28 = arith.truncf %25 : vector<128x128xf32> to vector<128x128xbf16>
    %29 = arith.truncf %15 : vector<128x128xf32> to vector<128x128xbf16>
    %cst_12 = arith.constant dense<0.000000e+00> : vector<128x128xf32>
    %30 = tpu.matmul %28, %29, %cst_12 {dimension_numbers = #tpu.dot_dimension_numbers<[1], [0], [0], [1], [0, 0, 1, 1], [], []>} : vector<128x128xbf16>, vector<128x128xbf16>, vector<128x128xf32> -> vector<128x128xf32>
    %31 = tpu.reciprocal %27 {approx = true} : vector<128x1xf32> -> vector<128x1xf32>
    %32 = vector.broadcast %31 : vector<128x1xf32> to vector<128x128xf32>
    %33 = arith.mulf %30, %32 : vector<128x128xf32>
    %34 = vector.extract_strided_slice %12 {offsets = [0, 128], sizes = [128, 128], strides = [1, 1]} : vector<128x768xf32> to vector<128x128xf32>
    %35 = vector.extract_strided_slice %12 {offsets = [0, 384], sizes = [128, 128], strides = [1, 1]} : vector<128x768xf32> to vector<128x128xf32>
    %36 = vector.extract_strided_slice %12 {offsets = [0, 640], sizes = [128, 128], strides = [1, 1]} : vector<128x768xf32> to vector<128x128xf32>
    %37 = arith.truncf %34 : vector<128x128xf32> to vector<128x128xbf16>
    %38 = arith.truncf %35 : vector<128x128xf32> to vector<128x128xbf16>
    %cst_13 = arith.constant dense<0.000000e+00> : vector<128x128xf32>
    %39 = tpu.matmul %37, %38, %cst_13 {dimension_numbers = #tpu.dot_dimension_numbers<[1], [1], [0], [0], [0, 0, 1, 0], [], []>} : vector<128x128xbf16>, vector<128x128xbf16>, vector<128x128xf32> -> vector<128x128xf32>
    %40 = vector.broadcast %9 : vector<1x128xf32> to vector<128x128xf32>
    %41 = arith.addf %39, %40 : vector<128x128xf32>
    %cst_14 = arith.constant dense<0xFF800000> : vector<128xf32>
    %42 = vector.multi_reduction <maximumf>, %41, %cst_14 [1] : vector<128x128xf32> to vector<128xf32>
    %43 = vector.shape_cast %42 : vector<128xf32> to vector<128x1xf32>
    %44 = vector.broadcast %43 : vector<128x1xf32> to vector<128x128xf32>
    %45 = arith.subf %41, %44 : vector<128x128xf32>
    %46 = math.exp %45 : vector<128x128xf32>
    %cst_15 = arith.constant dense<0.000000e+00> : vector<128xf32>
    %47 = vector.multi_reduction <add>, %46, %cst_15 [1] : vector<128x128xf32> to vector<128xf32>
    %48 = vector.shape_cast %47 : vector<128xf32> to vector<128x1xf32>
    %49 = arith.truncf %46 : vector<128x128xf32> to vector<128x128xbf16>
    %50 = arith.truncf %36 : vector<128x128xf32> to vector<128x128xbf16>
    %cst_16 = arith.constant dense<0.000000e+00> : vector<128x128xf32>
    %51 = tpu.matmul %49, %50, %cst_16 {dimension_numbers = #tpu.dot_dimension_numbers<[1], [0], [0], [1], [0, 0, 1, 1], [], []>} : vector<128x128xbf16>, vector<128x128xbf16>, vector<128x128xf32> -> vector<128x128xf32>
    %52 = tpu.reciprocal %48 {approx = true} : vector<128x1xf32> -> vector<128x1xf32>
    %53 = vector.broadcast %52 : vector<128x1xf32> to vector<128x128xf32>
    %54 = arith.mulf %51, %53 : vector<128x128xf32>
    %55 = tpu.concatenate %33, %54 in 1 : vector<128x128xf32>, vector<128x128xf32> -> vector<128x256xf32>
    %c0_17 = arith.constant 0 : index
    %c0_18 = arith.constant 0 : index
    %c0_19 = arith.constant 0 : index
    %56 = vector.load %arg6[%c0_17, %c0_18, %c0_19] : memref<1x128x256xf32, #tpu.memory_space<vmem>>, vector<1x128x256xf32>
    %57 = vector.shape_cast %56 : vector<1x128x256xf32> to vector<128x256xf32>
    %58 = vector.shape_cast %55 : vector<128x256xf32> to vector<1x128x256xf32>
    tpu.vector_store %arg6[%c0_17, %c0_18, %c0_19], %58 {strides = array<i32>} : memref<1x128x256xf32, #tpu.memory_space<vmem>>, vector<1x128x256xf32>,
    return
  }
  func.func @transform_0(%arg0: i32, %arg1: i32) -> (i32, i32, i32) {
    %c0_i32 = arith.constant 0 : i32
    %c0_i32_0 = arith.constant 0 : i32
    %c0_i32_1 = arith.constant 0 : i32
    return %arg0, %c0_i32, %c0_i32_0 : i32, i32, i32
  }
  func.func @transform_1(%arg0: i32, %arg1: i32) -> (i32, i32, i32) {
    %c0_i32 = arith.constant 0 : i32
    %c0_i32_0 = arith.constant 0 : i32
    %c0_i32_1 = arith.constant 0 : i32
    %c0_i32_2 = arith.constant 0 : i32
    return %c0_i32, %c0_i32_0, %c0_i32_1 : i32, i32, i32
  }
  func.func @transform_2(%arg0: i32, %arg1: i32) -> (i32, i32, i32) {
    %c0_i32 = arith.constant 0 : i32
    %c0_i32_0 = arith.constant 0 : i32
    %c0_i32_1 = arith.constant 0 : i32
    %c0_i32_2 = arith.constant 0 : i32
    return %c0_i32, %c0_i32_0, %c0_i32_1 : i32, i32, i32
  }
  func.func @transform_3(%arg0: i32, %arg1: i32) -> (i32, i32, i32) {
    %c0_i32 = arith.constant 0 : i32
    %c0_i32_0 = arith.constant 0 : i32
    %c0_i32_1 = arith.constant 0 : i32
    return %arg0, %c0_i32, %c0_i32_0 : i32, i32, i32
  }
  func.func @transform_4(%arg0: i32, %arg1: i32) -> (i32, i32, i32) {
    %c0_i32 = arith.constant 0 : i32
    %c0_i32_0 = arith.constant 0 : i32
    return %arg0, %c0_i32, %arg1 : i32, i32, i32
  }
}

</mosaic_0001>

<llo_original>
// kernel: tpu_custom_call.1
$region0: #{tpu_custom_call.1}
  #allocation0 [shape = 'u32[]', space=smem, size = 0x4, offset = 0x4, fixed_abs, tag = 'smem constant byte address 0x4 - core index']
  #allocation1 [shape = 'u32[144,128]{1,0:T(1,128)}', space=vmem, size = 0x12000, scoped, tag = 'internal scratch']
  %s0 = inlined_call_operand.hbm [shape: bf16[2,128,256], index: 0, kind: input, shape index: {}]
  %s1 = inlined_call_operand.hbm [shape: bf16[1,256,768], index: 1, kind: input, shape index: {}]
  %s2 = inlined_call_operand.vmem [shape: f32[1,1,768], index: 2, kind: input, shape index: {}]
  %s3 = inlined_call_operand.vmem [shape: f32[2,1,128], index: 3, kind: input, shape index: {}]
  %s4 = inlined_call_operand.hbm [shape: f32[2,128,256], index: 4, kind: output, shape index: {}]
  %s5 = sld [smem:[#allocation0]]
  $region57: #{tpu_custom_call.1} parent=0
    _
  %s7 = ssub.s32 1, %s5
  %s8 = scalar_select 0, %s7, %s5
  $region1: #{tpu_custom_call.1} parent=0
    #allocation2 [shape = 'u8[131072]{0}', space=vmem, size = 0x20000, scoped, tag = 'input window, operand 0']
    #allocation3 [shape = 's32[2]{0}', space=sflag, size = 0x8, scoped, tag = 'scoped memory for tpu_custom_call.1']
    #allocation4 [shape = 's32[2]{0}', space=sflag, size = 0x8, scoped, tag = 'scoped memory for tpu_custom_call.1']
    #allocation5 [shape = 'u8[393216]{0}', space=vmem, size = 0x60000, scoped, tag = 'input window, operand 1, single buffered']
    #allocation6 [shape = 's32[1]{0}', space=sflag, size = 0x4, scoped, tag = 'scoped memory for tpu_custom_call.1']
    #allocation7 [shape = 'u8[262144]{0}', space=vmem, size = 0x40000, scoped, tag = 'output window, operand 0']
    %9 = vsyncpa [#allocation3], 0
    %s10 = scalar_lea.sflag [#allocation3], 1
    %11 = vsyncpa %s10, 0
    %12 = vsyncpa [#allocation6], 0
    %13 = vsyncpa [#allocation4], 0
    %s14 = scalar_lea.sflag [#allocation4], 1
    %15 = vsyncpa %s14, 0
    loop: start=0, step=1, limit=4
    $region2: #{tpu_custom_call.1} parent=1 // loop_pre_header
      _
    $region3: #{tpu_custom_call.1} parent=1 // loop_header
      %s17 = sphi 0, %s21
      %p18 = scmp.ge.s32.totalorder %s17, 4
      %s24 = sphi 0, %s36
      %s25 = sphi 0, %s32
      %s26 = sphi 0, %s24
      %s27 = sphi 0, %s25
      %s28 = sphi 0, %s26
      %s29 = sphi 0, %s27
      %s39 = sphi 0, %s41
      %s42 = sphi 0, %s39
      %s43 = sphi 0, %s42
      %s59 = sphi 0, %s43
      %s63 = sphi 0, %s63
      %s65 = sphi 0, %s63
      %s66 = sphi 0, %s65
      %s80 = sphi 0, %s66
      %s84 = sphi 0, %s84
      %s86 = sphi 0, %s84
      %s87 = sphi 0, %s86
      %s101 = sphi 0, %s87
      %s107 = sphi 0, %s109
      %s110 = sphi 0, %s107
      %s111 = sphi 0, %s110
      %s127 = sphi 0, %s111
      %s135 = sphi 0, %s137
      %s138 = sphi 0, %s135
      %s139 = sphi 0, %s138
      %s155 = sphi 0, %s139
    $region4: #{tpu_custom_call.1} parent=1 // loop_header_branch
      %20 = sbr.rel (%p18) target = $region8
    $region5: #{tpu_custom_call.1} parent=1 // loop_body
      %s22 = ssub.s32 %s17, 1
      %s23 = ssub.s32 %s17, 2
      %s30 = sadd.s32 1, %s25
      %p31 = scmp.ge.s32.totalorder %s30, 1
      %s32 = scalar_select %p31, 0, %s30
      %s33 = sadd.s32 1, %s24
      %s34 = scalar_select %p31, %s33, %s24
      %p35 = scmp.ge.s32.totalorder %s34, 2
      %s36 = scalar_select %p35, 0, %s34
      %s37 = ssub.s32 %s24, %s36
      %p38 = scmp.eq.s32.totalorder %s37, 0
      %s40 = sadd.s32 %s39, 1
      %s41 = scalar_select %p38, %s39, %s40
      %p44 = pneg %p38
      %p45 = scmp.eq.s32.totalorder %s17, 1
      %p46 = por %p44, %p45
      %p47 = scmp.ne.s32.totalorder %s39, %s42
      %p48 = scmp.eq.s32.totalorder %s17, 0
      %p49 = por %p47, %p48
      %p50 = scmp.ne.s32.totalorder %s39, %s42
      %p51 = scmp.eq.s32.totalorder %s22, 1
      %p52 = por %p50, %p51
      %p53 = scmp.ne.s32.totalorder %s42, %s43
      %p54 = scmp.eq.s32.totalorder %s22, 0
      %p55 = por %p53, %p54
      %p56 = scmp.ne.s32.totalorder %s42, %s43
      %p57 = scmp.eq.s32.totalorder %s23, 1
      %p58 = por %p56, %p57
      %p60 = scmp.ne.s32.totalorder %s43, %s59
      %p61 = scmp.eq.s32.totalorder %s23, 0
      %p62 = por %p60, %p61
      %s64 = sadd.s32 %s63, 1
      %p67 = scmp.eq.s32.totalorder %s17, 1
      %p68 = scmp.ne.s32.totalorder %s63, %s65
      %p69 = scmp.eq.s32.totalorder %s17, 0
      %p70 = por %p68, %p69
      %p71 = scmp.ne.s32.totalorder %s63, %s65
      %p72 = scmp.eq.s32.totalorder %s22, 1
      %p73 = por %p71, %p72
      %p74 = scmp.ne.s32.totalorder %s65, %s66
      %p75 = scmp.eq.s32.totalorder %s22, 0
      %p76 = por %p74, %p75
      %p77 = scmp.ne.s32.totalorder %s65, %s66
      %p78 = scmp.eq.s32.totalorder %s23, 1
      %p79 = por %p77, %p78
      %p81 = scmp.ne.s32.totalorder %s66, %s80
      %p82 = scmp.eq.s32.totalorder %s23, 0
      %p83 = por %p81, %p82
      %s85 = sadd.s32 %s84, 1
      %p88 = scmp.eq.s32.totalorder %s17, 1
      %p89 = scmp.ne.s32.totalorder %s84, %s86
      %p90 = scmp.eq.s32.totalorder %s17, 0
      %p91 = por %p89, %p90
      %p92 = scmp.ne.s32.totalorder %s84, %s86
      %p93 = scmp.eq.s32.totalorder %s22, 1
      %p94 = por %p92, %p93
      %p95 = scmp.ne.s32.totalorder %s86, %s87
      %p96 = scmp.eq.s32.totalorder %s22, 0
      %p97 = por %p95, %p96
      %p98 = scmp.ne.s32.totalorder %s86, %s87
      %p99 = scmp.eq.s32.totalorder %s23, 1
      %p100 = por %p98, %p99
      %p102 = scmp.ne.s32.totalorder %s87, %s101
      %p103 = scmp.eq.s32.totalorder %s23, 0
      %p104 = por %p102, %p103
      %s105 = ssub.s32 %s24, %s36
      %p106 = scmp.eq.s32.totalorder %s105, 0
      %s108 = sadd.s32 %s107, 1
      %s109 = scalar_select %p106, %s107, %s108
      %p112 = pneg %p106
      %p113 = scmp.eq.s32.totalorder %s17, 1
      %p114 = por %p112, %p113
      %p115 = scmp.ne.s32.totalorder %s107, %s110
      %p116 = scmp.eq.s32.totalorder %s17, 0
      %p117 = por %p115, %p116
      %p118 = scmp.ne.s32.totalorder %s107, %s110
      %p119 = scmp.eq.s32.totalorder %s22, 1
      %p120 = por %p118, %p119
      %p121 = scmp.ne.s32.totalorder %s110, %s111
      %p122 = scmp.eq.s32.totalorder %s22, 0
      %p123 = por %p121, %p122
      %p124 = scmp.ne.s32.totalorder %s110, %s111
      %p125 = scmp.eq.s32.totalorder %s23, 1
      %p126 = por %p124, %p125
      %p128 = scmp.ne.s32.totalorder %s111, %s127
      %p129 = scmp.eq.s32.totalorder %s23, 0
      %p130 = por %p128, %p129
      %s131 = ssub.s32 %s24, %s36
      %s132 = ssub.s32 %s25, %s32
      %s133 = sor.u32 %s131, %s132
      %p134 = scmp.eq.s32.totalorder %s133, 0
      %s136 = sadd.s32 %s135, 1
      %s137 = scalar_select %p134, %s135, %s136
      %p140 = pneg %p134
      %p141 = scmp.eq.s32.totalorder %s17, 1
      %p142 = por %p140, %p141
      %p143 = scmp.ne.s32.totalorder %s135, %s138
      %p144 = scmp.eq.s32.totalorder %s17, 0
      %p145 = por %p143, %p144
      %p146 = scmp.ne.s32.totalorder %s135, %s138
      %p147 = scmp.eq.s32.totalorder %s22, 1
      %p148 = por %p146, %p147
      %p149 = scmp.ne.s32.totalorder %s138, %s139
      %p150 = scmp.eq.s32.totalorder %s22, 0
      %p151 = por %p149, %p150
      %p152 = scmp.ne.s32.totalorder %s138, %s139
      %p153 = scmp.eq.s32.totalorder %s23, 1
      %p154 = por %p152, %p153
      %p156 = scmp.ne.s32.totalorder %s139, %s155
      %p157 = scmp.eq.s32.totalorder %s23, 0
      %p158 = por %p156, %p157
      %p159 = scmp.le.s32.totalorder 1, %s17
      %p160 = scmp.lt.s32.totalorder %s17, 3
      %p161 = pnand %p159, %p160
      %p162 = pneg %p161
      // Predicated region
      $region9: #{tpu_custom_call.1} parent=5 // pred_check
        _
      $region10: #{tpu_custom_call.1} parent=5 // pred_check_branch
        %164 = sbr.rel (%p161) target = $region12
      $region11: #{tpu_custom_call.1} parent=5 // pred_region
        %s165 = ssub.s32 %s17, 1
        // Predicated region
        $region13: #{tpu_custom_call.1} parent=11 // pred_check
          %p166 = pneg %p76
        $region14: #{tpu_custom_call.1} parent=11 // pred_check_branch
          %168 = sbr.rel (%p166) target = $region16
        $region15: #{tpu_custom_call.1} parent=11 // pred_region
          %s170 = ssub.s32 12288, 12288
          %171 = vsyncadd [#allocation6], %s170
          %s172 = sshll.u32 [#allocation5], 4
          %s173 = int_to_ptr.vmem [resolvable:$true] %s172
          %178 = dma.hbm_to_vmem [thread:$0]  %s1, 12288, %s173, [#allocation6], 384, 384, 24
        $region16: #{tpu_custom_call.1} parent=11 // pred_fallthru
          _
        // Predicated region
        $region17: #{tpu_custom_call.1} parent=11 // pred_check
          %p179 = pneg %p97
        $region18: #{tpu_custom_call.1} parent=11 // pred_check_branch
          %181 = sbr.rel (%p179) target = $region20
        $region19: #{tpu_custom_call.1} parent=11 // pred_region
          _
        $region20: #{tpu_custom_call.1} parent=11 // pred_fallthru
          _
      $region12: #{tpu_custom_call.1} parent=5 // pred_fallthru
        _
      %p182 = scmp.lt.s32.totalorder %s17, 2
      // Predicated region
      $region21: #{tpu_custom_call.1} parent=5 // pred_check
        %p183 = pneg %p182
      $region22: #{tpu_custom_call.1} parent=5 // pred_check_branch
        %185 = sbr.rel (%p183) target = $region24
      $region23: #{tpu_custom_call.1} parent=5 // pred_region
        // Predicated region
        $region25: #{tpu_custom_call.1} parent=23 // pred_check
          %p186 = pneg %p49
        $region26: #{tpu_custom_call.1} parent=23 // pred_check_branch
          %188 = sbr.rel (%p186) target = $region28
        $region27: #{tpu_custom_call.1} parent=23 // pred_region
          %s189 = sand.u32 %s39, 1
          %s190 = scalar_lea.sflag [#allocation3], %s189
          %s191 = sand.u32 %s39, 1
          %s192 = smul.addr %s191, 128
          %s193 = scalar_lea.vmem [#allocation2], %s192
          %s195 = ssub.s32 2048, 2048
          %196 = vsyncadd %s190, %s195
          %s197 = smul.addr %s24, 32
          %s198 = smul.addr %s197, 64
          %s199 = scalar_lea.hbm %s0, %s198
          %s200 = sshll.u32 %s193, 4
          %s201 = int_to_ptr.vmem [resolvable:$true] %s200
          %206 = dma.hbm_to_vmem [thread:$0]  %s199, 2048, %s201, %s190, 128, 128, 8
        $region28: #{tpu_custom_call.1} parent=23 // pred_fallthru
          _
        // Predicated region
        $region29: #{tpu_custom_call.1} parent=23 // pred_check
          %p207 = pneg %p117
        $region30: #{tpu_custom_call.1} parent=23 // pred_check_branch
          %209 = sbr.rel (%p207) target = $region32
        $region31: #{tpu_custom_call.1} parent=23 // pred_region
          %p210 = scmp.lt.s32.totalorder %s24, 1
          %s211 = scalar_select %p210, %s24, 1
          %s212 = scalar_lea.vmem %s3, %s211
        $region32: #{tpu_custom_call.1} parent=23 // pred_fallthru
          _
      $region24: #{tpu_custom_call.1} parent=5 // pred_fallthru
        _
      %p213 = scmp.le.s32.totalorder 1, %s17
      %p214 = scmp.lt.s32.totalorder %s17, 3
      %p215 = pnand %p213, %p214
      %p216 = pneg %p215
      // Predicated region
      $region33: #{tpu_custom_call.1} parent=5 // pred_check
        _
      $region34: #{tpu_custom_call.1} parent=5 // pred_check_branch
        %218 = sbr.rel (%p215) target = $region36
      $region35: #{tpu_custom_call.1} parent=5 // pred_region
        %s219 = ssub.s32 %s17, 1
        %s220 = sand.u32 %s42, 1
        %s221 = scalar_lea.sflag [#allocation3], %s220
        %s222 = sand.u32 %s42, 1
        %s223 = smul.addr %s222, 128
        %s224 = scalar_lea.vmem [#allocation2], %s223
        // Predicated region
        $region37: #{tpu_custom_call.1} parent=35 // pred_check
          %p225 = pneg %p55
        $region38: #{tpu_custom_call.1} parent=35 // pred_check_branch
          %227 = sbr.rel (%p225) target = $region40
        $region39: #{tpu_custom_call.1} parent=35 // pred_region
          %228 = dma.done %s221, 2048
        $region40: #{tpu_custom_call.1} parent=35 // pred_fallthru
          _
        // Predicated region
        $region41: #{tpu_custom_call.1} parent=35 // pred_check
          %p229 = pneg %p76
        $region42: #{tpu_custom_call.1} parent=35 // pred_check_branch
          %231 = sbr.rel (%p229) target = $region44
        $region43: #{tpu_custom_call.1} parent=35 // pred_region
          %232 = dma.done [#allocation6], 12288
        $region44: #{tpu_custom_call.1} parent=35 // pred_fallthru
          _
        %s233 = sand.u32 %s42, 1
        %s234 = scalar_lea.sflag [#allocation3], %s233
        %s235 = sand.u32 %s42, 1
        %s236 = smul.addr %s235, 128
        %s237 = scalar_lea.vmem [#allocation2], %s236
        %p238 = pneg %p55
        %p239 = pneg %p52
        %p240 = pneg %p76
        %p241 = pneg %p73
        %p242 = pneg %p97
        %p243 = pneg %p94
        %p244 = scmp.lt.s32.totalorder %s26, 1
        %s245 = scalar_select %p244, %s26, 1
        %s246 = scalar_lea.vmem %s3, %s245
        %p247 = pneg %p123
        %p248 = pneg %p120
        %p249 = pneg %p151
        %p250 = pneg %p148
        %s251 = sand.u32 %s138, 1
        %s252 = scalar_lea.sflag [#allocation4], %s251
        %s253 = sand.u32 %s138, 1
        %s254 = smul.addr %s253, 256
        %s255 = scalar_lea.vmem [#allocation7], %s254
        %p256 = scmp.lt.s32.totalorder %s26, 1
        %s257 = scalar_select %p256, %s26, 1
        %s258 = scalar_lea.vmem %s3, %s257
        %s259 = smul.u32 2, %s27
        %v261 = vld [vmem:[%s224] sm:$0xff]
        %v262 = vld [vmem:[%s224 + $0x8] sm:$0xff]
        %v263 = vld [vmem:[%s224 + $0x10] sm:$0xff]
        %v264 = vld [vmem:[%s224 + $0x18] sm:$0xff]
        %v265 = vld [vmem:[%s224 + $0x20] sm:$0xff]
        %v266 = vld [vmem:[%s224 + $0x28] sm:$0xff]
        %v267 = vld [vmem:[%s224 + $0x30] sm:$0xff]
        %v268 = vld [vmem:[%s224 + $0x38] sm:$0xff]
        %v269 = vld [vmem:[%s224 + $0x40] sm:$0xff]
        %v270 = vld [vmem:[%s224 + $0x48] sm:$0xff]
        %v271 = vld [vmem:[%s224 + $0x50] sm:$0xff]
        %v272 = vld [vmem:[%s224 + $0x58] sm:$0xff]
        %v273 = vld [vmem:[%s224 + $0x60] sm:$0xff]
        %v274 = vld [vmem:[%s224 + $0x68] sm:$0xff]
        %v275 = vld [vmem:[%s224 + $0x70] sm:$0xff]
        %v276 = vld [vmem:[%s224 + $0x78] sm:$0xff]
        %s277 = smul.u32 %s27, 192
        %s278 = smul.addr %s277, 4
        %s279 = scalar_lea.vmem [#allocation5], %s278
        %v280 = vld [vmem:[%s279] sm:$0xff]
        %v281 = vld [vmem:[%s279 + $0x8] sm:$0xff]
        %v282 = vld [vmem:[%s279 + $0x10] sm:$0xff]
        %v283 = vld [vmem:[%s279 + $0x18] sm:$0xff]
        %v284 = vld [vmem:[%s279 + $0x20] sm:$0xff]
        %v285 = vld [vmem:[%s279 + $0x28] sm:$0xff]
        %v286 = vld [vmem:[%s279 + $0x30] sm:$0xff]
        %v287 = vld [vmem:[%s279 + $0x38] sm:$0xff]
        %v288 = vld [vmem:[%s279 + $0x40] sm:$0xff]
        %v289 = vld [vmem:[%s279 + $0x48] sm:$0xff]
        %v290 = vld [vmem:[%s279 + $0x50] sm:$0xff]
        %v291 = vld [vmem:[%s279 + $0x58] sm:$0xff]
        %v292 = vld [vmem:[%s279 + $0x60] sm:$0xff]
        %v293 = vld [vmem:[%s279 + $0x68] sm:$0xff]
        %v294 = vld [vmem:[%s279 + $0x70] sm:$0xff]
        %v295 = vld [vmem:[%s279 + $0x78] sm:$0xff]
        %v296 = vld [vmem:[%s279 + $0x80] sm:$0xff]
        %v297 = vld [vmem:[%s279 + $0x88] sm:$0xff]
        %v298 = vld [vmem:[%s279 + $0x90] sm:$0xff]
        %v299 = vld [vmem:[%s279 + $0x98] sm:$0xff]
        %v300 = vld [vmem:[%s279 + $0xa0] sm:$0xff]
        %v301 = vld [vmem:[%s279 + $0xa8] sm:$0xff]
        %v302 = vld [vmem:[%s279 + $0xb0] sm:$0xff]
        %v303 = vld [vmem:[%s279 + $0xb8] sm:$0xff]
        %v304 = vld [vmem:[%s279 + $0xc0] sm:$0xff]
        %v305 = vld [vmem:[%s279 + $0xc8] sm:$0xff]
        %v306 = vld [vmem:[%s279 + $0xd0] sm:$0xff]
        %v307 = vld [vmem:[%s279 + $0xd8] sm:$0xff]
        %v308 = vld [vmem:[%s279 + $0xe0] sm:$0xff]
        %v309 = vld [vmem:[%s279 + $0xe8] sm:$0xff]
        %v310 = vld [vmem:[%s279 + $0xf0] sm:$0xff]
        %v311 = vld [vmem:[%s279 + $0xf8] sm:$0xff]
        %v312 = vld [vmem:[%s279 + $0x100] sm:$0xff]
        %v313 = vld [vmem:[%s279 + $0x108] sm:$0xff]
        %v314 = vld [vmem:[%s279 + $0x110] sm:$0xff]
        %v315 = vld [vmem:[%s279 + $0x118] sm:$0xff]
        %v316 = vld [vmem:[%s279 + $0x120] sm:$0xff]
        %v317 = vld [vmem:[%s279 + $0x128] sm:$0xff]
        %v318 = vld [vmem:[%s279 + $0x130] sm:$0xff]
        %v319 = vld [vmem:[%s279 + $0x138] sm:$0xff]
        %v320 = vld [vmem:[%s279 + $0x140] sm:$0xff]
        %v321 = vld [vmem:[%s279 + $0x148] sm:$0xff]
        %v322 = vld [vmem:[%s279 + $0x150] sm:$0xff]
        %v323 = vld [vmem:[%s279 + $0x158] sm:$0xff]
        %v324 = vld [vmem:[%s279 + $0x160] sm:$0xff]
        %v325 = vld [vmem:[%s279 + $0x168] sm:$0xff]
        %v326 = vld [vmem:[%s279 + $0x170] sm:$0xff]
        %v327 = vld [vmem:[%s279 + $0x178] sm:$0xff]
        %v328 = vld [vmem:[%s279 + $0x180] sm:$0xff]
        %v329 = vld [vmem:[%s279 + $0x188] sm:$0xff]
        %v330 = vld [vmem:[%s279 + $0x190] sm:$0xff]
        %v331 = vld [vmem:[%s279 + $0x198] sm:$0xff]
        %v332 = vld [vmem:[%s279 + $0x1a0] sm:$0xff]
        %v333 = vld [vmem:[%s279 + $0x1a8] sm:$0xff]
        %v334 = vld [vmem:[%s279 + $0x1b0] sm:$0xff]
        %v335 = vld [vmem:[%s279 + $0x1b8] sm:$0xff]
        %v336 = vld [vmem:[%s279 + $0x1c0] sm:$0xff]
        %v337 = vld [vmem:[%s279 + $0x1c8] sm:$0xff]
        %v338 = vld [vmem:[%s279 + $0x1d0] sm:$0xff]
        %v339 = vld [vmem:[%s279 + $0x1d8] sm:$0xff]
        %v340 = vld [vmem:[%s279 + $0x1e0] sm:$0xff]
        %v341 = vld [vmem:[%s279 + $0x1e8] sm:$0xff]
        %v342 = vld [vmem:[%s279 + $0x1f0] sm:$0xff]
        %v343 = vld [vmem:[%s279 + $0x1f8] sm:$0xff]
        %v344 = vld [vmem:[%s279 + $0x200] sm:$0xff]
        %v345 = vld [vmem:[%s279 + $0x208] sm:$0xff]
        %v346 = vld [vmem:[%s279 + $0x210] sm:$0xff]
        %v347 = vld [vmem:[%s279 + $0x218] sm:$0xff]
        %v348 = vld [vmem:[%s279 + $0x220] sm:$0xff]
        %v349 = vld [vmem:[%s279 + $0x228] sm:$0xff]
        %v350 = vld [vmem:[%s279 + $0x230] sm:$0xff]
        %v351 = vld [vmem:[%s279 + $0x238] sm:$0xff]
        %v352 = vld [vmem:[%s279 + $0x240] sm:$0xff]
        %v353 = vld [vmem:[%s279 + $0x248] sm:$0xff]
        %v354 = vld [vmem:[%s279 + $0x250] sm:$0xff]
        %v355 = vld [vmem:[%s279 + $0x258] sm:$0xff]
        %v356 = vld [vmem:[%s279 + $0x260] sm:$0xff]
        %v357 = vld [vmem:[%s279 + $0x268] sm:$0xff]
        %v358 = vld [vmem:[%s279 + $0x270] sm:$0xff]
        %v359 = vld [vmem:[%s279 + $0x278] sm:$0xff]
        %v360 = vld [vmem:[%s279 + $0x280] sm:$0xff]
        %v361 = vld [vmem:[%s279 + $0x288] sm:$0xff]
        %v362 = vld [vmem:[%s279 + $0x290] sm:$0xff]
        %v363 = vld [vmem:[%s279 + $0x298] sm:$0xff]
        %v364 = vld [vmem:[%s279 + $0x2a0] sm:$0xff]
        %v365 = vld [vmem:[%s279 + $0x2a8] sm:$0xff]
        %v366 = vld [vmem:[%s279 + $0x2b0] sm:$0xff]
        %v367 = vld [vmem:[%s279 + $0x2b8] sm:$0xff]
        %v368 = vld [vmem:[%s279 + $0x2c0] sm:$0xff]
        %v369 = vld [vmem:[%s279 + $0x2c8] sm:$0xff]
        %v370 = vld [vmem:[%s279 + $0x2d0] sm:$0xff]
        %v371 = vld [vmem:[%s279 + $0x2d8] sm:$0xff]
        %v372 = vld [vmem:[%s279 + $0x2e0] sm:$0xff]
        %v373 = vld [vmem:[%s279 + $0x2e8] sm:$0xff]
        %v374 = vld [vmem:[%s279 + $0x2f0] sm:$0xff]
        %v375 = vld [vmem:[%s279 + $0x2f8] sm:$0xff]
        %s376 = smul.u32 %s27, 6
        %s377 = scalar_lea.vmem %s2, %s376
        %v378 = vld [vmem:[%s377] sm:$0x3f]
        %v379 = vld [vmem:[%s258] sm:$0x1]
        %v381 = vlaneseq
        %v382 = vshrl.u32 %v381, 7
        %v383 = vsub.s32 0, %v382
        %v384 = vrot.slane %v378, %v383
        %v385 = vlaneseq
        %v386 = vshrl.u32 %v385, 7
        %v387 = vsub.s32 1, %v386
        %v388 = vrot.slane %v378, %v387
        %v389 = vlaneseq
        %v390 = vshrl.u32 %v389, 7
        %v391 = vsub.s32 2, %v390
        %v392 = vrot.slane %v378, %v391
        %v393 = vlaneseq
        %v394 = vshrl.u32 %v393, 7
        %v395 = vsub.s32 3, %v394
        %v396 = vrot.slane %v378, %v395
        %v397 = vlaneseq
        %v398 = vshrl.u32 %v397, 7
        %v399 = vsub.s32 4, %v398
        %v400 = vrot.slane %v378, %v399
        %v401 = vlaneseq
        %v402 = vshrl.u32 %v401, 7
        %v403 = vsub.s32 5, %v402
        %v404 = vrot.slane %v378, %v403
        %v427 = vunpack.c.l.b16 %v261
        %v428 = vunpack.c.h.b16 %v261
        %v429 = vunpack.c.l.b16 %v262
        %v430 = vunpack.c.h.b16 %v262
        %v431 = vunpack.c.l.b16 %v263
        %v432 = vunpack.c.h.b16 %v263
        %v433 = vunpack.c.l.b16 %v264
        %v434 = vunpack.c.h.b16 %v264
        %v435 = vunpack.c.l.b16 %v265
        %v436 = vunpack.c.h.b16 %v265
        %v437 = vunpack.c.l.b16 %v266
        %v438 = vunpack.c.h.b16 %v266
        %v439 = vunpack.c.l.b16 %v267
        %v440 = vunpack.c.h.b16 %v267
        %v441 = vunpack.c.l.b16 %v268
        %v442 = vunpack.c.h.b16 %v268
        %v443 = vunpack.c.l.b16 %v269
        %v444 = vunpack.c.h.b16 %v269
        %v445 = vunpack.c.l.b16 %v270
        %v446 = vunpack.c.h.b16 %v270
        %v447 = vunpack.c.l.b16 %v271
        %v448 = vunpack.c.h.b16 %v271
        %v449 = vunpack.c.l.b16 %v272
        %v450 = vunpack.c.h.b16 %v272
        %v451 = vunpack.c.l.b16 %v273
        %v452 = vunpack.c.h.b16 %v273
        %v453 = vunpack.c.l.b16 %v274
        %v454 = vunpack.c.h.b16 %v274
        %v455 = vunpack.c.l.b16 %v275
        %v456 = vunpack.c.h.b16 %v275
        %v457 = vunpack.c.l.b16 %v276
        %v458 = vunpack.c.h.b16 %v276
        %v459 = vpack.c.b16 %v429, %v427
        %v460 = vpack.c.b16 %v430, %v428
        %v461 = vpack.c.b16 %v433, %v431
        %v462 = vpack.c.b16 %v434, %v432
        %v463 = vpack.c.b16 %v437, %v435
        %v464 = vpack.c.b16 %v438, %v436
        %v465 = vpack.c.b16 %v441, %v439
        %v466 = vpack.c.b16 %v442, %v440
        %v467 = vpack.c.b16 %v445, %v443
        %v468 = vpack.c.b16 %v446, %v444
        %v469 = vpack.c.b16 %v449, %v447
        %v470 = vpack.c.b16 %v450, %v448
        %v471 = vpack.c.b16 %v453, %v451
        %v472 = vpack.c.b16 %v454, %v452
        %v473 = vpack.c.b16 %v457, %v455
        %v474 = vpack.c.b16 %v458, %v456
        %v587 = vunpack.c.l.b16 %v280
        %v588 = vunpack.c.h.b16 %v280
        %v589 = vunpack.c.l.b16 %v281
        %v590 = vunpack.c.h.b16 %v281
        %v591 = vunpack.c.l.b16 %v282
        %v592 = vunpack.c.h.b16 %v282
        %v593 = vunpack.c.l.b16 %v283
        %v594 = vunpack.c.h.b16 %v283
        %v595 = vunpack.c.l.b16 %v284
        %v596 = vunpack.c.h.b16 %v284
        %v597 = vunpack.c.l.b16 %v285
        %v598 = vunpack.c.h.b16 %v285
        %v599 = vunpack.c.l.b16 %v286
        %v600 = vunpack.c.h.b16 %v286
        %v601 = vunpack.c.l.b16 %v287
        %v602 = vunpack.c.h.b16 %v287
        %v603 = vunpack.c.l.b16 %v288
        %v604 = vunpack.c.h.b16 %v288
        %v605 = vunpack.c.l.b16 %v289
        %v606 = vunpack.c.h.b16 %v289
        %v607 = vunpack.c.l.b16 %v290
        %v608 = vunpack.c.h.b16 %v290
        %v609 = vunpack.c.l.b16 %v291
        %v610 = vunpack.c.h.b16 %v291
        %v611 = vunpack.c.l.b16 %v292
        %v612 = vunpack.c.h.b16 %v292
        %v613 = vunpack.c.l.b16 %v293
        %v614 = vunpack.c.h.b16 %v293
        %v615 = vunpack.c.l.b16 %v294
        %v616 = vunpack.c.h.b16 %v294
        %v617 = vunpack.c.l.b16 %v295
        %v618 = vunpack.c.h.b16 %v295
        %v619 = vunpack.c.l.b16 %v296
        %v620 = vunpack.c.h.b16 %v296
        %v621 = vunpack.c.l.b16 %v297
        %v622 = vunpack.c.h.b16 %v297
        %v623 = vunpack.c.l.b16 %v298
        %v624 = vunpack.c.h.b16 %v298
        %v625 = vunpack.c.l.b16 %v299
        %v626 = vunpack.c.h.b16 %v299
        %v627 = vunpack.c.l.b16 %v300
        %v628 = vunpack.c.h.b16 %v300
        %v629 = vunpack.c.l.b16 %v301
        %v630 = vunpack.c.h.b16 %v301
        %v631 = vunpack.c.l.b16 %v302
        %v632 = vunpack.c.h.b16 %v302
        %v633 = vunpack.c.l.b16 %v303
        %v634 = vunpack.c.h.b16 %v303
        %v635 = vunpack.c.l.b16 %v304
        %v636 = vunpack.c.h.b16 %v304
        %v637 = vunpack.c.l.b16 %v305
        %v638 = vunpack.c.h.b16 %v305
        %v639 = vunpack.c.l.b16 %v306
        %v640 = vunpack.c.h.b16 %v306
        %v641 = vunpack.c.l.b16 %v307
        %v642 = vunpack.c.h.b16 %v307
        %v643 = vunpack.c.l.b16 %v308
        %v644 = vunpack.c.h.b16 %v308
        %v645 = vunpack.c.l.b16 %v309
        %v646 = vunpack.c.h.b16 %v309
        %v647 = vunpack.c.l.b16 %v310
        %v648 = vunpack.c.h.b16 %v310
        %v649 = vunpack.c.l.b16 %v311
        %v650 = vunpack.c.h.b16 %v311
        %v651 = vunpack.c.l.b16 %v312
        %v652 = vunpack.c.h.b16 %v312
        %v653 = vunpack.c.l.b16 %v313
        %v654 = vunpack.c.h.b16 %v313
        %v655 = vunpack.c.l.b16 %v314
        %v656 = vunpack.c.h.b16 %v314
        %v657 = vunpack.c.l.b16 %v315
        %v658 = vunpack.c.h.b16 %v315
        %v659 = vunpack.c.l.b16 %v316
        %v660 = vunpack.c.h.b16 %v316
        %v661 = vunpack.c.l.b16 %v317
        %v662 = vunpack.c.h.b16 %v317
        %v663 = vunpack.c.l.b16 %v318
        %v664 = vunpack.c.h.b16 %v318
        %v665 = vunpack.c.l.b16 %v319
        %v666 = vunpack.c.h.b16 %v319
        %v667 = vunpack.c.l.b16 %v320
        %v668 = vunpack.c.h.b16 %v320
        %v669 = vunpack.c.l.b16 %v321
        %v670 = vunpack.c.h.b16 %v321
        %v671 = vunpack.c.l.b16 %v322
        %v672 = vunpack.c.h.b16 %v322
        %v673 = vunpack.c.l.b16 %v323
        %v674 = vunpack.c.h.b16 %v323
        %v675 = vunpack.c.l.b16 %v324
        %v676 = vunpack.c.h.b16 %v324
        %v677 = vunpack.c.l.b16 %v325
        %v678 = vunpack.c.h.b16 %v325
        %v679 = vunpack.c.l.b16 %v326
        %v680 = vunpack.c.h.b16 %v326
        %v681 = vunpack.c.l.b16 %v327
        %v682 = vunpack.c.h.b16 %v327
        %v683 = vunpack.c.l.b16 %v328
        %v684 = vunpack.c.h.b16 %v328
        %v685 = vunpack.c.l.b16 %v329
        %v686 = vunpack.c.h.b16 %v329
        %v687 = vunpack.c.l.b16 %v330
        %v688 = vunpack.c.h.b16 %v330
        %v689 = vunpack.c.l.b16 %v331
        %v690 = vunpack.c.h.b16 %v331
        %v691 = vunpack.c.l.b16 %v332
        %v692 = vunpack.c.h.b16 %v332
        %v693 = vunpack.c.l.b16 %v333
        %v694 = vunpack.c.h.b16 %v333
        %v695 = vunpack.c.l.b16 %v334
        %v696 = vunpack.c.h.b16 %v334
        %v697 = vunpack.c.l.b16 %v335
        %v698 = vunpack.c.h.b16 %v335
        %v699 = vunpack.c.l.b16 %v336
        %v700 = vunpack.c.h.b16 %v336
        %v701 = vunpack.c.l.b16 %v337
        %v702 = vunpack.c.h.b16 %v337
        %v703 = vunpack.c.l.b16 %v338
        %v704 = vunpack.c.h.b16 %v338
        %v705 = vunpack.c.l.b16 %v339
        %v706 = vunpack.c.h.b16 %v339
        %v707 = vunpack.c.l.b16 %v340
        %v708 = vunpack.c.h.b16 %v340
        %v709 = vunpack.c.l.b16 %v341
        %v710 = vunpack.c.h.b16 %v341
        %v711 = vunpack.c.l.b16 %v342
        %v712 = vunpack.c.h.b16 %v342
        %v713 = vunpack.c.l.b16 %v343
        %v714 = vunpack.c.h.b16 %v343
        %v715 = vunpack.c.l.b16 %v344
        %v716 = vunpack.c.h.b16 %v344
        %v717 = vunpack.c.l.b16 %v345
        %v718 = vunpack.c.h.b16 %v345
        %v719 = vunpack.c.l.b16 %v346
        %v720 = vunpack.c.h.b16 %v346
        %v721 = vunpack.c.l.b16 %v347
        %v722 = vunpack.c.h.b16 %v347
        %v723 = vunpack.c.l.b16 %v348
        %v724 = vunpack.c.h.b16 %v348
        %v725 = vunpack.c.l.b16 %v349
        %v726 = vunpack.c.h.b16 %v349
        %v727 = vunpack.c.l.b16 %v350
        %v728 = vunpack.c.h.b16 %v350
        %v729 = vunpack.c.l.b16 %v351
        %v730 = vunpack.c.h.b16 %v351
        %v731 = vunpack.c.l.b16 %v352
        %v732 = vunpack.c.h.b16 %v352
        %v733 = vunpack.c.l.b16 %v353
        %v734 = vunpack.c.h.b16 %v353
        %v735 = vunpack.c.l.b16 %v354
        %v736 = vunpack.c.h.b16 %v354
        %v737 = vunpack.c.l.b16 %v355
        %v738 = vunpack.c.h.b16 %v355
        %v739 = vunpack.c.l.b16 %v356
        %v740 = vunpack.c.h.b16 %v356
        %v741 = vunpack.c.l.b16 %v357
        %v742 = vunpack.c.h.b16 %v357
        %v743 = vunpack.c.l.b16 %v358
        %v744 = vunpack.c.h.b16 %v358
        %v745 = vunpack.c.l.b16 %v359
        %v746 = vunpack.c.h.b16 %v359
        %v747 = vunpack.c.l.b16 %v360
        %v748 = vunpack.c.h.b16 %v360
        %v749 = vunpack.c.l.b16 %v361
        %v750 = vunpack.c.h.b16 %v361
        %v751 = vunpack.c.l.b16 %v362
        %v752 = vunpack.c.h.b16 %v362
        %v753 = vunpack.c.l.b16 %v363
        %v754 = vunpack.c.h.b16 %v363
        %v755 = vunpack.c.l.b16 %v364
        %v756 = vunpack.c.h.b16 %v364
        %v757 = vunpack.c.l.b16 %v365
        %v758 = vunpack.c.h.b16 %v365
        %v759 = vunpack.c.l.b16 %v366
        %v760 = vunpack.c.h.b16 %v366
        %v761 = vunpack.c.l.b16 %v367
        %v762 = vunpack.c.h.b16 %v367
        %v763 = vunpack.c.l.b16 %v368
        %v764 = vunpack.c.h.b16 %v368
        %v765 = vunpack.c.l.b16 %v369
        %v766 = vunpack.c.h.b16 %v369
        %v767 = vunpack.c.l.b16 %v370
        %v768 = vunpack.c.h.b16 %v370
        %v769 = vunpack.c.l.b16 %v371
        %v770 = vunpack.c.h.b16 %v371
        %v771 = vunpack.c.l.b16 %v372
        %v772 = vunpack.c.h.b16 %v372
        %v773 = vunpack.c.l.b16 %v373
        %v774 = vunpack.c.h.b16 %v373
        %v775 = vunpack.c.l.b16 %v374
        %v776 = vunpack.c.h.b16 %v374
        %v777 = vunpack.c.l.b16 %v375
        %v778 = vunpack.c.h.b16 %v375
        %v779 = vpack.c.b16 %v593, %v587
        %v780 = vpack.c.b16 %v594, %v588
        %v781 = vpack.c.b16 %v595, %v589
        %v782 = vpack.c.b16 %v596, %v590
        %v783 = vpack.c.b16 %v597, %v591
        %v784 = vpack.c.b16 %v598, %v592
        %v785 = vpack.c.b16 %v605, %v599
        %v786 = vpack.c.b16 %v606, %v600
        %v787 = vpack.c.b16 %v607, %v601
        %v788 = vpack.c.b16 %v608, %v602
        %v789 = vpack.c.b16 %v609, %v603
        %v790 = vpack.c.b16 %v610, %v604
        %v791 = vpack.c.b16 %v617, %v611
        %v792 = vpack.c.b16 %v618, %v612
        %v793 = vpack.c.b16 %v619, %v613
        %v794 = vpack.c.b16 %v620, %v614
        %v795 = vpack.c.b16 %v621, %v615
        %v796 = vpack.c.b16 %v622, %v616
        %v797 = vpack.c.b16 %v629, %v623
        %v798 = vpack.c.b16 %v630, %v624
        %v799 = vpack.c.b16 %v631, %v625
        %v800 = vpack.c.b16 %v632, %v626
        %v801 = vpack.c.b16 %v633, %v627
        %v802 = vpack.c.b16 %v634, %v628
        %v803 = vpack.c.b16 %v641, %v635
        %v804 = vpack.c.b16 %v642, %v636
        %v805 = vpack.c.b16 %v643, %v637
        %v806 = vpack.c.b16 %v644, %v638
        %v807 = vpack.c.b16 %v645, %v639
        %v808 = vpack.c.b16 %v646, %v640
        %v809 = vpack.c.b16 %v653, %v647
        %v810 = vpack.c.b16 %v654, %v648
        %v811 = vpack.c.b16 %v655, %v649
        %v812 = vpack.c.b16 %v656, %v650
        %v813 = vpack.c.b16 %v657, %v651
        %v814 = vpack.c.b16 %v658, %v652
        %v815 = vpack.c.b16 %v665, %v659
        %v816 = vpack.c.b16 %v666, %v660
        %v817 = vpack.c.b16 %v667, %v661
        %v818 = vpack.c.b16 %v668, %v662
        %v819 = vpack.c.b16 %v669, %v663
        %v820 = vpack.c.b16 %v670, %v664
        %v821 = vpack.c.b16 %v677, %v671
        %v822 = vpack.c.b16 %v678, %v672
        %v823 = vpack.c.b16 %v679, %v673
        %v824 = vpack.c.b16 %v680, %v674
        %v825 = vpack.c.b16 %v681, %v675
        %v826 = vpack.c.b16 %v682, %v676
        %v827 = vpack.c.b16 %v689, %v683
        %v828 = vpack.c.b16 %v690, %v684
        %v829 = vpack.c.b16 %v691, %v685
        %v830 = vpack.c.b16 %v692, %v686
        %v831 = vpack.c.b16 %v693, %v687
        %v832 = vpack.c.b16 %v694, %v688
        %v833 = vpack.c.b16 %v701, %v695
        %v834 = vpack.c.b16 %v702, %v696
        %v835 = vpack.c.b16 %v703, %v697
        %v836 = vpack.c.b16 %v704, %v698
        %v837 = vpack.c.b16 %v705, %v699
        %v838 = vpack.c.b16 %v706, %v700
        %v839 = vpack.c.b16 %v713, %v707
        %v840 = vpack.c.b16 %v714, %v708
        %v841 = vpack.c.b16 %v715, %v709
        %v842 = vpack.c.b16 %v716, %v710
        %v843 = vpack.c.b16 %v717, %v711
        %v844 = vpack.c.b16 %v718, %v712
        %v845 = vpack.c.b16 %v725, %v719
        %v846 = vpack.c.b16 %v726, %v720
        %v847 = vpack.c.b16 %v727, %v721
        %v848 = vpack.c.b16 %v728, %v722
        %v849 = vpack.c.b16 %v729, %v723
        %v850 = vpack.c.b16 %v730, %v724
        %v851 = vpack.c.b16 %v737, %v731
        %v852 = vpack.c.b16 %v738, %v732
        %v853 = vpack.c.b16 %v739, %v733
        %v854 = vpack.c.b16 %v740, %v734
        %v855 = vpack.c.b16 %v741, %v735
        %v856 = vpack.c.b16 %v742, %v736
        %v857 = vpack.c.b16 %v749, %v743
        %v858 = vpack.c.b16 %v750, %v744
        %v859 = vpack.c.b16 %v751, %v745
        %v860 = vpack.c.b16 %v752, %v746
        %v861 = vpack.c.b16 %v753, %v747
        %v862 = vpack.c.b16 %v754, %v748
        %v863 = vpack.c.b16 %v761, %v755
        %v864 = vpack.c.b16 %v762, %v756
        %v865 = vpack.c.b16 %v763, %v757
        %v866 = vpack.c.b16 %v764, %v758
        %v867 = vpack.c.b16 %v765, %v759
        %v868 = vpack.c.b16 %v766, %v760
        %v869 = vpack.c.b16 %v773, %v767
        %v870 = vpack.c.b16 %v774, %v768
        %v871 = vpack.c.b16 %v775, %v769
        %v872 = vpack.c.b16 %v776, %v770
        %v873 = vpack.c.b16 %v777, %v771
        %v874 = vpack.c.b16 %v778, %v772
        %971 = vmatprep.subr.bf16.mxu0 %v780
        %972 = vmatpush1.bf16.msra.mxu0 %v779
        %973 = vmatprep.subr.bf16.mxu0 %v786
        %974 = vmatpush1.bf16.msra.mxu0 %v785
        %975 = vmatprep.subr.bf16.mxu0 %v792
        %976 = vmatpush1.bf16.msra.mxu0 %v791
        %977 = vmatprep.subr.bf16.mxu0 %v798
        %978 = vmatpush1.bf16.msra.mxu0 %v797
        %979 = vmatprep.subr.bf16.mxu0 %v804
        %980 = vmatpush1.bf16.msra.mxu0 %v803
        %981 = vmatprep.subr.bf16.mxu0 %v810
        %982 = vmatpush1.bf16.msra.mxu0 %v809
        %983 = vmatprep.subr.bf16.mxu0 %v816
        %984 = vmatpush1.bf16.msra.mxu0 %v815
        %985 = vmatprep.subr.bf16.mxu0 %v822
        %986 = vmatpush1.bf16.msra.mxu0 %v821
        %987 = vmatprep.subr.bf16.mxu0 %v828
        %988 = vmatpush1.bf16.msra.mxu0 %v827
        %989 = vmatprep.subr.bf16.mxu0 %v834
        %990 = vmatpush1.bf16.msra.mxu0 %v833
        %991 = vmatprep.subr.bf16.mxu0 %v840
        %992 = vmatpush1.bf16.msra.mxu0 %v839
        %993 = vmatprep.subr.bf16.mxu0 %v846
        %994 = vmatpush1.bf16.msra.mxu0 %v845
        %995 = vmatprep.subr.bf16.mxu0 %v852
        %996 = vmatpush1.bf16.msra.mxu0 %v851
        %997 = vmatprep.subr.bf16.mxu0 %v858
        %998 = vmatpush1.bf16.msra.mxu0 %v857
        %999 = vmatprep.subr.bf16.mxu0 %v864
        %1000 = vmatpush1.bf16.msra.mxu0 %v863
        %1001 = vmatprep.subr.bf16.mxu0 %v870
        %1002 = vmatpush1.bf16.msra.mxu0 %v869
        %1003 = vmatprep.mubr.bf16.mxu0 %v460
        %1004 = vmatmul.mubr.bf16.gmra.mrb[0].mxu0 %v459
        %v1005 = vpop.f32.mrb[0].mxu0
        %v1006 = vadd.f32 %v384, %v1005
        %v1007 = vpop.f32.mrb[0].mxu0
        %v1008 = vadd.f32 %v388, %v1007
        %v1009 = vpop.f32.mrb[0].mxu0
        %v1010 = vadd.f32 %v384, %v1009
        %v1011 = vpop.f32.mrb[0].mxu0
        %v1012 = vadd.f32 %v388, %v1011
        %1013 = vmatprep.mubr.bf16.mxu0 %v462
        %1014 = vmatmul.mubr.bf16.gmra.mrb[0].mxu0 %v461
        %v1015 = vpop.f32.mrb[0].mxu0
        %v1016 = vadd.f32 %v384, %v1015
        %v1017 = vpop.f32.mrb[0].mxu0
        %v1018 = vadd.f32 %v388, %v1017
        %v1019 = vpop.f32.mrb[0].mxu0
        %v1020 = vadd.f32 %v384, %v1019
        %v1021 = vpop.f32.mrb[0].mxu0
        %v1022 = vadd.f32 %v388, %v1021
        %1023 = vmatprep.mubr.bf16.mxu0 %v464
        %1024 = vmatmul.mubr.bf16.gmra.mrb[0].mxu0 %v463
        %v1025 = vpop.f32.mrb[0].mxu0
        %v1026 = vadd.f32 %v384, %v1025
        %v1027 = vpop.f32.mrb[0].mxu0
        %v1028 = vadd.f32 %v388, %v1027
        %v1029 = vpop.f32.mrb[0].mxu0
        %v1030 = vadd.f32 %v384, %v1029
        %v1031 = vpop.f32.mrb[0].mxu0
        %v1032 = vadd.f32 %v388, %v1031
        %1033 = vmatprep.mubr.bf16.mxu0 %v466
        %1034 = vmatmul.mubr.bf16.gmra.mrb[0].mxu0 %v465
        %v1035 = vpop.f32.mrb[0].mxu0
        %v1036 = vadd.f32 %v384, %v1035
        %v1037 = vpop.f32.mrb[0].mxu0
        %v1038 = vadd.f32 %v388, %v1037
        %v1039 = vpop.f32.mrb[0].mxu0
        %v1040 = vadd.f32 %v384, %v1039
        %v1041 = vpop.f32.mrb[0].mxu0
        %v1042 = vadd.f32 %v388, %v1041
        %1043 = vmatprep.mubr.bf16.mxu0 %v468
        %1044 = vmatmul.mubr.bf16.gmra.mrb[0].mxu0 %v467
        %v1045 = vpop.f32.mrb[0].mxu0
        %v1046 = vadd.f32 %v384, %v1045
        %v1047 = vpop.f32.mrb[0].mxu0
        %v1048 = vadd.f32 %v388, %v1047
        %v1049 = vpop.f32.mrb[0].mxu0
        %v1050 = vadd.f32 %v384, %v1049
        %v1051 = vpop.f32.mrb[0].mxu0
        %v1052 = vadd.f32 %v388, %v1051
        %1053 = vmatprep.mubr.bf16.mxu0 %v470
        %1054 = vmatmul.mubr.bf16.gmra.mrb[0].mxu0 %v469
        %v1055 = vpop.f32.mrb[0].mxu0
        %v1056 = vadd.f32 %v384, %v1055
        %v1057 = vpop.f32.mrb[0].mxu0
        %v1058 = vadd.f32 %v388, %v1057
        %v1059 = vpop.f32.mrb[0].mxu0
        %v1060 = vadd.f32 %v384, %v1059
        %v1061 = vpop.f32.mrb[0].mxu0
        %v1062 = vadd.f32 %v388, %v1061
        %1063 = vmatprep.mubr.bf16.mxu0 %v472
        %1064 = vmatmul.mubr.bf16.gmra.mrb[0].mxu0 %v471
        %v1065 = vpop.f32.mrb[0].mxu0
        %v1066 = vadd.f32 %v384, %v1065
        %v1067 = vpop.f32.mrb[0].mxu0
        %v1068 = vadd.f32 %v388, %v1067
        %v1069 = vpop.f32.mrb[0].mxu0
        %v1070 = vadd.f32 %v384, %v1069
        %v1071 = vpop.f32.mrb[0].mxu0
        %v1072 = vadd.f32 %v388, %v1071
        %1073 = vmatprep.mubr.bf16.mxu0 %v474
        %1074 = vmatmul.mubr.bf16.gmra.mrb[0].mxu0 %v473
        %v1075 = vpop.f32.mrb[0].mxu0
        %v1076 = vadd.f32 %v384, %v1075
        %v1077 = vpop.f32.mrb[0].mxu0
        %v1078 = vadd.f32 %v388, %v1077
        %v1079 = vpop.f32.mrb[0].mxu0
        %v1080 = vadd.f32 %v384, %v1079
        %v1081 = vpop.f32.mrb[0].mxu0
        %v1082 = vadd.f32 %v388, %v1081
        %1083 = vdwg.mxu0
        %1084 = vmatprep.subr.bf16.mxu0 %v782
        %1085 = vmatpush1.bf16.msra.mxu0 %v781
        %1086 = vmatprep.subr.bf16.mxu0 %v788
        %1087 = vmatpush1.bf16.msra.mxu0 %v787
        %1088 = vmatprep.subr.bf16.mxu0 %v794
        %1089 = vmatpush1.bf16.msra.mxu0 %v793
        %1090 = vmatprep.subr.bf16.mxu0 %v800
        %1091 = vmatpush1.bf16.msra.mxu0 %v799
        %1092 = vmatprep.subr.bf16.mxu0 %v806
        %1093 = vmatpush1.bf16.msra.mxu0 %v805
        %1094 = vmatprep.subr.bf16.mxu0 %v812
        %1095 = vmatpush1.bf16.msra.mxu0 %v811
        %1096 = vmatprep.subr.bf16.mxu0 %v818
        %1097 = vmatpush1.bf16.msra.mxu0 %v817
        %1098 = vmatprep.subr.bf16.mxu0 %v824
        %1099 = vmatpush1.bf16.msra.mxu0 %v823
        %1100 = vmatprep.subr.bf16.mxu0 %v830
        %1101 = vmatpush1.bf16.msra.mxu0 %v829
        %1102 = vmatprep.subr.bf16.mxu0 %v836
        %1103 = vmatpush1.bf16.msra.mxu0 %v835
        %1104 = vmatprep.subr.bf16.mxu0 %v842
        %1105 = vmatpush1.bf16.msra.mxu0 %v841
        %1106 = vmatprep.subr.bf16.mxu0 %v848
        %1107 = vmatpush1.bf16.msra.mxu0 %v847
        %1108 = vmatprep.subr.bf16.mxu0 %v854
        %1109 = vmatpush1.bf16.msra.mxu0 %v853
        %1110 = vmatprep.subr.bf16.mxu0 %v860
        %1111 = vmatpush1.bf16.msra.mxu0 %v859
        %1112 = vmatprep.subr.bf16.mxu0 %v866
        %1113 = vmatpush1.bf16.msra.mxu0 %v865
        %1114 = vmatprep.subr.bf16.mxu0 %v872
        %1115 = vmatpush1.bf16.msra.mxu0 %v871
        %1116 = vmatprep.mubr.bf16.mxu0 %v460
        %1117 = vmatmul.mubr.bf16.gmra.mrb[0].mxu0 %v459
        %v1118 = vpop.f32.mrb[0].mxu0
        %v1119 = vadd.f32 %v392, %v1118
        %v1120 = vpop.f32.mrb[0].mxu0
        %v1121 = vadd.f32 %v396, %v1120
        %v1122 = vpop.f32.mrb[0].mxu0
        %v1123 = vadd.f32 %v392, %v1122
        %v1124 = vpop.f32.mrb[0].mxu0
        %v1125 = vadd.f32 %v396, %v1124
        %1126 = vmatprep.mubr.bf16.mxu0 %v462
        %1127 = vmatmul.mubr.bf16.gmra.mrb[0].mxu0 %v461
        %v1128 = vpop.f32.mrb[0].mxu0
        %v1129 = vadd.f32 %v392, %v1128
        %v1130 = vpop.f32.mrb[0].mxu0
        %v1131 = vadd.f32 %v396, %v1130
        %v1132 = vpop.f32.mrb[0].mxu0
        %v1133 = vadd.f32 %v392, %v1132
        %v1134 = vpop.f32.mrb[0].mxu0
        %v1135 = vadd.f32 %v396, %v1134
        %1136 = vmatprep.mubr.bf16.mxu0 %v464
        %1137 = vmatmul.mubr.bf16.gmra.mrb[0].mxu0 %v463
        %v1138 = vpop.f32.mrb[0].mxu0
        %v1139 = vadd.f32 %v392, %v1138
        %v1140 = vpop.f32.mrb[0].mxu0
        %v1141 = vadd.f32 %v396, %v1140
        %v1142 = vpop.f32.mrb[0].mxu0
        %v1143 = vadd.f32 %v392, %v1142
        %v1144 = vpop.f32.mrb[0].mxu0
        %v1145 = vadd.f32 %v396, %v1144
        %1146 = vmatprep.mubr.bf16.mxu0 %v466
        %1147 = vmatmul.mubr.bf16.gmra.mrb[0].mxu0 %v465
        %v1148 = vpop.f32.mrb[0].mxu0
        %v1149 = vadd.f32 %v392, %v1148
        %v1150 = vpop.f32.mrb[0].mxu0
        %v1151 = vadd.f32 %v396, %v1150
        %v1152 = vpop.f32.mrb[0].mxu0
        %v1153 = vadd.f32 %v392, %v1152
        %v1154 = vpop.f32.mrb[0].mxu0
        %v1155 = vadd.f32 %v396, %v1154
        %1156 = vmatprep.mubr.bf16.mxu0 %v468
        %1157 = vmatmul.mubr.bf16.gmra.mrb[0].mxu0 %v467
        %v1158 = vpop.f32.mrb[0].mxu0
        %v1159 = vadd.f32 %v392, %v1158
        %v1160 = vpop.f32.mrb[0].mxu0
        %v1161 = vadd.f32 %v396, %v1160
        %v1162 = vpop.f32.mrb[0].mxu0
        %v1163 = vadd.f32 %v392, %v1162
        %v1164 = vpop.f32.mrb[0].mxu0
        %v1165 = vadd.f32 %v396, %v1164
        %1166 = vmatprep.mubr.bf16.mxu0 %v470
        %1167 = vmatmul.mubr.bf16.gmra.mrb[0].mxu0 %v469
        %v1168 = vpop.f32.mrb[0].mxu0
        %v1169 = vadd.f32 %v392, %v1168
        %v1170 = vpop.f32.mrb[0].mxu0
        %v1171 = vadd.f32 %v396, %v1170
        %v1172 = vpop.f32.mrb[0].mxu0
        %v1173 = vadd.f32 %v392, %v1172
        %v1174 = vpop.f32.mrb[0].mxu0
        %v1175 = vadd.f32 %v396, %v1174
        %1176 = vmatprep.mubr.bf16.mxu0 %v472
        %1177 = vmatmul.mubr.bf16.gmra.mrb[0].mxu0 %v471
        %v1178 = vpop.f32.mrb[0].mxu0
        %v1179 = vadd.f32 %v392, %v1178
        %v1180 = vpop.f32.mrb[0].mxu0
        %v1181 = vadd.f32 %v396, %v1180
        %v1182 = vpop.f32.mrb[0].mxu0
        %v1183 = vadd.f32 %v392, %v1182
        %v1184 = vpop.f32.mrb[0].mxu0
        %v1185 = vadd.f32 %v396, %v1184
        %1186 = vmatprep.mubr.bf16.mxu0 %v474
        %1187 = vmatmul.mubr.bf16.gmra.mrb[0].mxu0 %v473
        %v1188 = vpop.f32.mrb[0].mxu0
        %v1189 = vadd.f32 %v392, %v1188
        %v1190 = vpop.f32.mrb[0].mxu0
        %v1191 = vadd.f32 %v396, %v1190
        %v1192 = vpop.f32.mrb[0].mxu0
        %v1193 = vadd.f32 %v392, %v1192
        %v1194 = vpop.f32.mrb[0].mxu0
        %v1195 = vadd.f32 %v396, %v1194
        %1196 = vdwg.mxu0
        %1197 = vmatprep.subr.bf16.mxu0 %v784
        %1198 = vmatpush1.bf16.msra.mxu0 %v783
        %1199 = vmatprep.subr.bf16.mxu0 %v790
        %1200 = vmatpush1.bf16.msra.mxu0 %v789
        %1201 = vmatprep.subr.bf16.mxu0 %v796
        %1202 = vmatpush1.bf16.msra.mxu0 %v795
        %1203 = vmatprep.subr.bf16.mxu0 %v802
        %1204 = vmatpush1.bf16.msra.mxu0 %v801
        %1205 = vmatprep.subr.bf16.mxu0 %v808
        %1206 = vmatpush1.bf16.msra.mxu0 %v807
        %1207 = vmatprep.subr.bf16.mxu0 %v814
        %1208 = vmatpush1.bf16.msra.mxu0 %v813
        %1209 = vmatprep.subr.bf16.mxu0 %v820
        %1210 = vmatpush1.bf16.msra.mxu0 %v819
        %1211 = vmatprep.subr.bf16.mxu0 %v826
        %1212 = vmatpush1.bf16.msra.mxu0 %v825
        %1213 = vmatprep.subr.bf16.mxu0 %v832
        %1214 = vmatpush1.bf16.msra.mxu0 %v831
        %1215 = vmatprep.subr.bf16.mxu0 %v838
        %1216 = vmatpush1.bf16.msra.mxu0 %v837
        %1217 = vmatprep.subr.bf16.mxu0 %v844
        %1218 = vmatpush1.bf16.msra.mxu0 %v843
        %1219 = vmatprep.subr.bf16.mxu0 %v850
        %1220 = vmatpush1.bf16.msra.mxu0 %v849
        %1221 = vmatprep.subr.bf16.mxu0 %v856
        %1222 = vmatpush1.bf16.msra.mxu0 %v855
        %1223 = vmatprep.subr.bf16.mxu0 %v862
        %1224 = vmatpush1.bf16.msra.mxu0 %v861
        %1225 = vmatprep.subr.bf16.mxu0 %v868
        %1226 = vmatpush1.bf16.msra.mxu0 %v867
        %1227 = vmatprep.subr.bf16.mxu0 %v874
        %1228 = vmatpush1.bf16.msra.mxu0 %v873
        %1229 = vmatprep.mubr.bf16.mxu0 %v460
        %1230 = vmatmul.mubr.bf16.gmra.mrb[0].mxu0 %v459
        %v1231 = vpop.f32.mrb[0].mxu0
        %v1232 = vadd.f32 %v400, %v1231
        %v1233 = vpop.f32.mrb[0].mxu0
        %v1234 = vadd.f32 %v404, %v1233
        %v1235 = vpop.f32.mrb[0].mxu0
        %v1236 = vadd.f32 %v400, %v1235
        %v1237 = vpop.f32.mrb[0].mxu0
        %v1238 = vadd.f32 %v404, %v1237
        %1239 = vmatprep.mubr.bf16.mxu0 %v462
        %1240 = vmatmul.mubr.bf16.gmra.mrb[0].mxu0 %v461
        %v1241 = vpop.f32.mrb[0].mxu0
        %v1242 = vadd.f32 %v400, %v1241
        %v1243 = vpop.f32.mrb[0].mxu0
        %v1244 = vadd.f32 %v404, %v1243
        %v1245 = vpop.f32.mrb[0].mxu0
        %v1246 = vadd.f32 %v400, %v1245
        %v1247 = vpop.f32.mrb[0].mxu0
        %v1248 = vadd.f32 %v404, %v1247
        %1249 = vmatprep.mubr.bf16.mxu0 %v464
        %1250 = vmatmul.mubr.bf16.gmra.mrb[0].mxu0 %v463
        %v1251 = vpop.f32.mrb[0].mxu0
        %v1252 = vadd.f32 %v400, %v1251
        %v1253 = vpop.f32.mrb[0].mxu0
        %v1254 = vadd.f32 %v404, %v1253
        %v1255 = vpop.f32.mrb[0].mxu0
        %v1256 = vadd.f32 %v400, %v1255
        %v1257 = vpop.f32.mrb[0].mxu0
        %v1258 = vadd.f32 %v404, %v1257
        %1259 = vmatprep.mubr.bf16.mxu0 %v466
        %1260 = vmatmul.mubr.bf16.gmra.mrb[0].mxu0 %v465
        %v1261 = vpop.f32.mrb[0].mxu0
        %v1262 = vadd.f32 %v400, %v1261
        %v1263 = vpop.f32.mrb[0].mxu0
        %v1264 = vadd.f32 %v404, %v1263
        %v1265 = vpop.f32.mrb[0].mxu0
        %v1266 = vadd.f32 %v400, %v1265
        %v1267 = vpop.f32.mrb[0].mxu0
        %v1268 = vadd.f32 %v404, %v1267
        %1269 = vmatprep.mubr.bf16.mxu0 %v468
        %1270 = vmatmul.mubr.bf16.gmra.mrb[0].mxu0 %v467
        %v1271 = vpop.f32.mrb[0].mxu0
        %v1272 = vadd.f32 %v400, %v1271
        %v1273 = vpop.f32.mrb[0].mxu0
        %v1274 = vadd.f32 %v404, %v1273
        %v1275 = vpop.f32.mrb[0].mxu0
        %v1276 = vadd.f32 %v400, %v1275
        %v1277 = vpop.f32.mrb[0].mxu0
        %v1278 = vadd.f32 %v404, %v1277
        %1279 = vmatprep.mubr.bf16.mxu0 %v470
        %1280 = vmatmul.mubr.bf16.gmra.mrb[0].mxu0 %v469
        %v1281 = vpop.f32.mrb[0].mxu0
        %v1282 = vadd.f32 %v400, %v1281
        %v1283 = vpop.f32.mrb[0].mxu0
        %v1284 = vadd.f32 %v404, %v1283
        %v1285 = vpop.f32.mrb[0].mxu0
        %v1286 = vadd.f32 %v400, %v1285
        %v1287 = vpop.f32.mrb[0].mxu0
        %v1288 = vadd.f32 %v404, %v1287
        %1289 = vmatprep.mubr.bf16.mxu0 %v472
        %1290 = vmatmul.mubr.bf16.gmra.mrb[0].mxu0 %v471
        %v1291 = vpop.f32.mrb[0].mxu0
        %v1292 = vadd.f32 %v400, %v1291
        %v1293 = vpop.f32.mrb[0].mxu0
        %v1294 = vadd.f32 %v404, %v1293
        %v1295 = vpop.f32.mrb[0].mxu0
        %v1296 = vadd.f32 %v400, %v1295
        %v1297 = vpop.f32.mrb[0].mxu0
        %v1298 = vadd.f32 %v404, %v1297
        %1299 = vmatprep.mubr.bf16.mxu0 %v474
        %1300 = vmatmul.mubr.bf16.gmra.mrb[0].mxu0 %v473
        %v1301 = vpop.f32.mrb[0].mxu0
        %v1302 = vadd.f32 %v400, %v1301
        %v1303 = vpop.f32.mrb[0].mxu0
        %v1304 = vadd.f32 %v404, %v1303
        %v1305 = vpop.f32.mrb[0].mxu0
        %v1306 = vadd.f32 %v400, %v1305
        %v1307 = vpop.f32.mrb[0].mxu0
        %v1308 = vadd.f32 %v404, %v1307
        %1309 = vdwg.mxu0
        %v1310 = vpack.c.bf16 %v1010, %v1006
        %v1311 = vpack.c.bf16 %v1020, %v1016
        %v1312 = vpack.c.bf16 %v1030, %v1026
        %v1313 = vpack.c.bf16 %v1040, %v1036
        %v1314 = vpack.c.bf16 %v1050, %v1046
        %v1315 = vpack.c.bf16 %v1060, %v1056
        %v1316 = vpack.c.bf16 %v1070, %v1066
        %v1317 = vpack.c.bf16 %v1080, %v1076
        %v1318 = vpack.c.bf16 %v1123, %v1119
        %v1319 = vpack.c.bf16 %v1133, %v1129
        %v1320 = vpack.c.bf16 %v1143, %v1139
        %v1321 = vpack.c.bf16 %v1153, %v1149
        %v1322 = vpack.c.bf16 %v1163, %v1159
        %v1323 = vpack.c.bf16 %v1173, %v1169
        %v1324 = vpack.c.bf16 %v1183, %v1179
        %v1325 = vpack.c.bf16 %v1193, %v1189
        %v1327 = vlaneseq
        %v1328 = vshrl.u32 %v1327, 7
        %v1329 = vsub.s32 0, %v1328
        %v1330 = vrot.slane %v379, %v1329
        %1332 = vmatprep.subr.bf16.mxu0 0
        %1333 = vmatpush1.bf16.xpose.msra.mxu0 %v1318
        %1334 = vmatprep.subr.bf16.mxu0 0
        %1335 = vmatpush1.bf16.xpose.msra.mxu0 %v1319
        %1336 = vmatprep.subr.bf16.mxu0 0
        %1337 = vmatpush1.bf16.xpose.msra.mxu0 %v1320
        %1338 = vmatprep.subr.bf16.mxu0 0
        %1339 = vmatpush1.bf16.xpose.msra.mxu0 %v1321
        %1340 = vmatprep.subr.bf16.mxu0 0
        %1341 = vmatpush1.bf16.xpose.msra.mxu0 %v1322
        %1342 = vmatprep.subr.bf16.mxu0 0
        %1343 = vmatpush1.bf16.xpose.msra.mxu0 %v1323
        %1344 = vmatprep.subr.bf16.mxu0 0
        %1345 = vmatpush1.bf16.xpose.msra.mxu0 %v1324
        %1346 = vmatprep.subr.bf16.mxu0 0
        %1347 = vmatpush1.bf16.xpose.msra.mxu0 %v1325
        %1348 = vmatprep.subr.bf16.mxu0 0
        %1349 = vmatpush1.bf16.xpose.msra.mxu0 0
        %1350 = vmatprep.subr.bf16.mxu0 0
        %1351 = vmatpush1.bf16.xpose.msra.mxu0 0
        %1352 = vmatprep.subr.bf16.mxu0 0
        %1353 = vmatpush1.bf16.xpose.msra.mxu0 0
        %1354 = vmatprep.subr.bf16.mxu0 0
        %1355 = vmatpush1.bf16.xpose.msra.mxu0 0
        %1356 = vmatprep.subr.bf16.mxu0 0
        %1357 = vmatpush1.bf16.xpose.msra.mxu0 0
        %1358 = vmatprep.subr.bf16.mxu0 0
        %1359 = vmatpush1.bf16.xpose.msra.mxu0 0
        %1360 = vmatprep.subr.bf16.mxu0 0
        %1361 = vmatpush1.bf16.xpose.msra.mxu0 0
        %1362 = vmatprep.subr.bf16.mxu0 0
        %1363 = vmatpush1.bf16.xpose.msra.mxu0 0
        %1364 = vmatprep.mubr.bf16.mxu0 0
        %1365 = vmatmul.mubr.bf16.gmra.mrb[0].mxu0 %v1310
        %v1366 = vpop.f32.mrb[0].mxu0
        %v1367 = vadd.f32 %v1330, %v1366
        %v1368 = vpop.f32.mrb[0].mxu0
        %v1369 = vpop.f32.mrb[0].mxu0
        %v1370 = vadd.f32 %v1330, %v1369
        %v1371 = vpop.f32.mrb[0].mxu0
        %1372 = vmatprep.mubr.bf16.mxu0 0
        %1373 = vmatmul.mubr.bf16.gmra.mrb[0].mxu0 %v1311
        %v1374 = vpop.f32.mrb[0].mxu0
        %v1375 = vadd.f32 %v1330, %v1374
        %v1376 = vpop.f32.mrb[0].mxu0
        %v1377 = vpop.f32.mrb[0].mxu0
        %v1378 = vadd.f32 %v1330, %v1377
        %v1379 = vpop.f32.mrb[0].mxu0
        %1380 = vmatprep.mubr.bf16.mxu0 0
        %1381 = vmatmul.mubr.bf16.gmra.mrb[0].mxu0 %v1312
        %v1382 = vpop.f32.mrb[0].mxu0
        %v1383 = vadd.f32 %v1330, %v1382
        %v1384 = vpop.f32.mrb[0].mxu0
        %v1385 = vpop.f32.mrb[0].mxu0
        %v1386 = vadd.f32 %v1330, %v1385
        %v1387 = vpop.f32.mrb[0].mxu0
        %1388 = vmatprep.mubr.bf16.mxu0 0
        %1389 = vmatmul.mubr.bf16.gmra.mrb[0].mxu0 %v1313
        %v1390 = vpop.f32.mrb[0].mxu0
        %v1391 = vadd.f32 %v1330, %v1390
        %v1392 = vpop.f32.mrb[0].mxu0
        %v1393 = vpop.f32.mrb[0].mxu0
        %v1394 = vadd.f32 %v1330, %v1393
        %v1395 = vpop.f32.mrb[0].mxu0
        %1396 = vmatprep.mubr.bf16.mxu0 0
        %1397 = vmatmul.mubr.bf16.gmra.mrb[0].mxu0 %v1314
        %v1398 = vpop.f32.mrb[0].mxu0
        %v1399 = vadd.f32 %v1330, %v1398
        %v1400 = vpop.f32.mrb[0].mxu0
        %v1401 = vpop.f32.mrb[0].mxu0
        %v1402 = vadd.f32 %v1330, %v1401
        %v1403 = vpop.f32.mrb[0].mxu0
        %1404 = vmatprep.mubr.bf16.mxu0 0
        %1405 = vmatmul.mubr.bf16.gmra.mrb[0].mxu0 %v1315
        %v1406 = vpop.f32.mrb[0].mxu0
        %v1407 = vadd.f32 %v1330, %v1406
        %v1408 = vpop.f32.mrb[0].mxu0
        %v1409 = vpop.f32.mrb[0].mxu0
        %v1410 = vadd.f32 %v1330, %v1409
        %v1411 = vpop.f32.mrb[0].mxu0
        %1412 = vmatprep.mubr.bf16.mxu0 0
        %1413 = vmatmul.mubr.bf16.gmra.mrb[0].mxu0 %v1316
        %v1414 = vpop.f32.mrb[0].mxu0
        %v1415 = vadd.f32 %v1330, %v1414
        %v1416 = vpop.f32.mrb[0].mxu0
        %v1417 = vpop.f32.mrb[0].mxu0
        %v1418 = vadd.f32 %v1330, %v1417
        %v1419 = vpop.f32.mrb[0].mxu0
        %1420 = vmatprep.mubr.bf16.mxu0 0
        %1421 = vmatmul.mubr.bf16.gmra.mrb[0].mxu0 %v1317
        %v1422 = vpop.f32.mrb[0].mxu0
        %v1423 = vadd.f32 %v1330, %v1422
        %v1424 = vpop.f32.mrb[0].mxu0
        %v1425 = vpop.f32.mrb[0].mxu0
        %v1426 = vadd.f32 %v1330, %v1425
        %v1427 = vpop.f32.mrb[0].mxu0
        %1428 = vdwg.mxu0
        %1429 = vmax.xlane.f32.xlu0 %v1367
        %v1430 = vpop.xlane.xlu0 %1429
        %1431 = vmax.xlane.f32.xlu0 %v1370
        %v1432 = vpop.xlane.xlu0 %1431
        %1433 = vmax.xlane.f32.xlu0 %v1375
        %v1434 = vpop.xlane.xlu0 %1433
        %1435 = vmax.xlane.f32.xlu0 %v1378
        %v1436 = vpop.xlane.xlu0 %1435
        %1437 = vmax.xlane.f32.xlu0 %v1383
        %v1438 = vpop.xlane.xlu0 %1437
        %1439 = vmax.xlane.f32.xlu0 %v1386
        %v1440 = vpop.xlane.xlu0 %1439
        %1441 = vmax.xlane.f32.xlu0 %v1391
        %v1442 = vpop.xlane.xlu0 %1441
        %1443 = vmax.xlane.f32.xlu0 %v1394
        %v1444 = vpop.xlane.xlu0 %1443
        %1445 = vmax.xlane.f32.xlu0 %v1399
        %v1446 = vpop.xlane.xlu0 %1445
        %1447 = vmax.xlane.f32.xlu0 %v1402
        %v1448 = vpop.xlane.xlu0 %1447
        %1449 = vmax.xlane.f32.xlu0 %v1407
        %v1450 = vpop.xlane.xlu0 %1449
        %1451 = vmax.xlane.f32.xlu0 %v1410
        %v1452 = vpop.xlane.xlu0 %1451
        %1453 = vmax.xlane.f32.xlu0 %v1415
        %v1454 = vpop.xlane.xlu0 %1453
        %1455 = vmax.xlane.f32.xlu0 %v1418
        %v1456 = vpop.xlane.xlu0 %1455
        %1457 = vmax.xlane.f32.xlu0 %v1423
        %v1458 = vpop.xlane.xlu0 %1457
        %1459 = vmax.xlane.f32.xlu0 %v1426
        %v1460 = vpop.xlane.xlu0 %1459
        %v1461 = vsub.f32 %v1367, %v1430
        %v1462 = vsub.f32 %v1370, %v1432
        %v1463 = vsub.f32 %v1375, %v1434
        %v1464 = vsub.f32 %v1378, %v1436
        %v1465 = vsub.f32 %v1383, %v1438
        %v1466 = vsub.f32 %v1386, %v1440
        %v1467 = vsub.f32 %v1391, %v1442
        %v1468 = vsub.f32 %v1394, %v1444
        %v1469 = vsub.f32 %v1399, %v1446
        %v1470 = vsub.f32 %v1402, %v1448
        %v1471 = vsub.f32 %v1407, %v1450
        %v1472 = vsub.f32 %v1410, %v1452
        %v1473 = vsub.f32 %v1415, %v1454
        %v1474 = vsub.f32 %v1418, %v1456
        %v1475 = vsub.f32 %v1423, %v1458
        %v1476 = vsub.f32 %v1426, %v1460
        %v1477 = vmul.f32 %v1461, 1.442695
        %v1478 = vpow.pop %v1477
        %v1479 = vmul.f32 %v1462, 1.442695
        %v1480 = vpow.pop %v1479
        %v1481 = vmul.f32 %v1463, 1.442695
        %v1482 = vpow.pop %v1481
        %v1483 = vmul.f32 %v1464, 1.442695
        %v1484 = vpow.pop %v1483
        %v1485 = vmul.f32 %v1465, 1.442695
        %v1486 = vpow.pop %v1485
        %v1487 = vmul.f32 %v1466, 1.442695
        %v1488 = vpow.pop %v1487
        %v1489 = vmul.f32 %v1467, 1.442695
        %v1490 = vpow.pop %v1489
        %v1491 = vmul.f32 %v1468, 1.442695
        %v1492 = vpow.pop %v1491
        %v1493 = vmul.f32 %v1469, 1.442695
        %v1494 = vpow.pop %v1493
        %v1495 = vmul.f32 %v1470, 1.442695
        %v1496 = vpow.pop %v1495
        %v1497 = vmul.f32 %v1471, 1.442695
        %v1498 = vpow.pop %v1497
        %v1499 = vmul.f32 %v1472, 1.442695
        %v1500 = vpow.pop %v1499
        %v1501 = vmul.f32 %v1473, 1.442695
        %v1502 = vpow.pop %v1501
        %v1503 = vmul.f32 %v1474, 1.442695
        %v1504 = vpow.pop %v1503
        %v1505 = vmul.f32 %v1475, 1.442695
        %v1506 = vpow.pop %v1505
        %v1507 = vmul.f32 %v1476, 1.442695
        %v1508 = vpow.pop %v1507
        %1509 = vadd.xlane.f32.xlu0 %v1478
        %v1510 = vpop.xlane.xlu0 %1509
        %1511 = vadd.xlane.f32.xlu0 %v1480
        %v1512 = vpop.xlane.xlu0 %1511
        %1513 = vadd.xlane.f32.xlu0 %v1482
        %v1514 = vpop.xlane.xlu0 %1513
        %1515 = vadd.xlane.f32.xlu0 %v1484
        %v1516 = vpop.xlane.xlu0 %1515
        %1517 = vadd.xlane.f32.xlu0 %v1486
        %v1518 = vpop.xlane.xlu0 %1517
        %1519 = vadd.xlane.f32.xlu0 %v1488
        %v1520 = vpop.xlane.xlu0 %1519
        %1521 = vadd.xlane.f32.xlu0 %v1490
        %v1522 = vpop.xlane.xlu0 %1521
        %1523 = vadd.xlane.f32.xlu0 %v1492
        %v1524 = vpop.xlane.xlu0 %1523
        %1525 = vadd.xlane.f32.xlu0 %v1494
        %v1526 = vpop.xlane.xlu0 %1525
        %1527 = vadd.xlane.f32.xlu0 %v1496
        %v1528 = vpop.xlane.xlu0 %1527
        %1529 = vadd.xlane.f32.xlu0 %v1498
        %v1530 = vpop.xlane.xlu0 %1529
        %1531 = vadd.xlane.f32.xlu0 %v1500
        %v1532 = vpop.xlane.xlu0 %1531
        %1533 = vadd.xlane.f32.xlu0 %v1502
        %v1534 = vpop.xlane.xlu0 %1533
        %1535 = vadd.xlane.f32.xlu0 %v1504
        %v1536 = vpop.xlane.xlu0 %1535
        %1537 = vadd.xlane.f32.xlu0 %v1506
        %v1538 = vpop.xlane.xlu0 %1537
        %1539 = vadd.xlane.f32.xlu0 %v1508
        %v1540 = vpop.xlane.xlu0 %1539
        %v1541 = vpack.c.bf16 %v1480, %v1478
        %v1542 = vpack.c.bf16 %v1484, %v1482
        %v1543 = vpack.c.bf16 %v1488, %v1486
        %v1544 = vpack.c.bf16 %v1492, %v1490
        %v1545 = vpack.c.bf16 %v1496, %v1494
        %v1546 = vpack.c.bf16 %v1500, %v1498
        %v1547 = vpack.c.bf16 %v1504, %v1502
        %v1548 = vpack.c.bf16 %v1508, %v1506
        %v1549 = vpack.c.bf16 %v1236, %v1232
        %v1550 = vpack.c.bf16 %v1246, %v1242
        %v1551 = vpack.c.bf16 %v1256, %v1252
        %v1552 = vpack.c.bf16 %v1266, %v1262
        %v1553 = vpack.c.bf16 %v1276, %v1272
        %v1554 = vpack.c.bf16 %v1286, %v1282
        %v1555 = vpack.c.bf16 %v1296, %v1292
        %v1556 = vpack.c.bf16 %v1306, %v1302
        %1557 = vmatprep.subr.bf16.mxu0 0
        %1558 = vmatpush1.bf16.msra.mxu0 %v1549
        %1559 = vmatprep.subr.bf16.mxu0 0
        %1560 = vmatpush1.bf16.msra.mxu0 %v1550
        %1561 = vmatprep.subr.bf16.mxu0 0
        %1562 = vmatpush1.bf16.msra.mxu0 %v1551
        %1563 = vmatprep.subr.bf16.mxu0 0
        %1564 = vmatpush1.bf16.msra.mxu0 %v1552
        %1565 = vmatprep.subr.bf16.mxu0 0
        %1566 = vmatpush1.bf16.msra.mxu0 %v1553
        %1567 = vmatprep.subr.bf16.mxu0 0
        %1568 = vmatpush1.bf16.msra.mxu0 %v1554
        %1569 = vmatprep.subr.bf16.mxu0 0
        %1570 = vmatpush1.bf16.msra.mxu0 %v1555
        %1571 = vmatprep.subr.bf16.mxu0 0
        %1572 = vmatpush1.bf16.msra.mxu0 %v1556
        %1573 = vmatprep.subr.bf16.mxu0 0
        %1574 = vmatpush1.bf16.msra.mxu0 0
        %1575 = vmatprep.subr.bf16.mxu0 0
        %1576 = vmatpush1.bf16.msra.mxu0 0
        %1577 = vmatprep.subr.bf16.mxu0 0
        %1578 = vmatpush1.bf16.msra.mxu0 0
        %1579 = vmatprep.subr.bf16.mxu0 0
        %1580 = vmatpush1.bf16.msra.mxu0 0
        %1581 = vmatprep.subr.bf16.mxu0 0
        %1582 = vmatpush1.bf16.msra.mxu0 0
        %1583 = vmatprep.subr.bf16.mxu0 0
        %1584 = vmatpush1.bf16.msra.mxu0 0
        %1585 = vmatprep.subr.bf16.mxu0 0
        %1586 = vmatpush1.bf16.msra.mxu0 0
        %1587 = vmatprep.subr.bf16.mxu0 0
        %1588 = vmatpush1.bf16.msra.mxu0 0
        %1589 = vmatprep.mubr.bf16.mxu0 0
        %1590 = vmatmul.mubr.bf16.gmra.mrb[0].mxu0 %v1541
        %v1591 = vpop.f32.mrb[0].mxu0
        %v1592 = vadd.f32 0.0, %v1591
        %v1593 = vpop.f32.mrb[0].mxu0
        %v1594 = vpop.f32.mrb[0].mxu0
        %v1595 = vadd.f32 0.0, %v1594
        %v1596 = vpop.f32.mrb[0].mxu0
        %1597 = vmatprep.mubr.bf16.mxu0 0
        %1598 = vmatmul.mubr.bf16.gmra.mrb[0].mxu0 %v1542
        %v1599 = vpop.f32.mrb[0].mxu0
        %v1600 = vadd.f32 0.0, %v1599
        %v1601 = vpop.f32.mrb[0].mxu0
        %v1602 = vpop.f32.mrb[0].mxu0
        %v1603 = vadd.f32 0.0, %v1602
        %v1604 = vpop.f32.mrb[0].mxu0
        %1605 = vmatprep.mubr.bf16.mxu0 0
        %1606 = vmatmul.mubr.bf16.gmra.mrb[0].mxu0 %v1543
        %v1607 = vpop.f32.mrb[0].mxu0
        %v1608 = vadd.f32 0.0, %v1607
        %v1609 = vpop.f32.mrb[0].mxu0
        %v1610 = vpop.f32.mrb[0].mxu0
        %v1611 = vadd.f32 0.0, %v1610
        %v1612 = vpop.f32.mrb[0].mxu0
        %1613 = vmatprep.mubr.bf16.mxu0 0
        %1614 = vmatmul.mubr.bf16.gmra.mrb[0].mxu0 %v1544
        %v1615 = vpop.f32.mrb[0].mxu0
        %v1616 = vadd.f32 0.0, %v1615
        %v1617 = vpop.f32.mrb[0].mxu0
        %v1618 = vpop.f32.mrb[0].mxu0
        %v1619 = vadd.f32 0.0, %v1618
        %v1620 = vpop.f32.mrb[0].mxu0
        %1621 = vmatprep.mubr.bf16.mxu0 0
        %1622 = vmatmul.mubr.bf16.gmra.mrb[0].mxu0 %v1545
        %v1623 = vpop.f32.mrb[0].mxu0
        %v1624 = vadd.f32 0.0, %v1623
        %v1625 = vpop.f32.mrb[0].mxu0
        %v1626 = vpop.f32.mrb[0].mxu0
        %v1627 = vadd.f32 0.0, %v1626
        %v1628 = vpop.f32.mrb[0].mxu0
        %1629 = vmatprep.mubr.bf16.mxu0 0
        %1630 = vmatmul.mubr.bf16.gmra.mrb[0].mxu0 %v1546
        %v1631 = vpop.f32.mrb[0].mxu0
        %v1632 = vadd.f32 0.0, %v1631
        %v1633 = vpop.f32.mrb[0].mxu0
        %v1634 = vpop.f32.mrb[0].mxu0
        %v1635 = vadd.f32 0.0, %v1634
        %v1636 = vpop.f32.mrb[0].mxu0
        %1637 = vmatprep.mubr.bf16.mxu0 0
        %1638 = vmatmul.mubr.bf16.gmra.mrb[0].mxu0 %v1547
        %v1639 = vpop.f32.mrb[0].mxu0
        %v1640 = vadd.f32 0.0, %v1639
        %v1641 = vpop.f32.mrb[0].mxu0
        %v1642 = vpop.f32.mrb[0].mxu0
        %v1643 = vadd.f32 0.0, %v1642
        %v1644 = vpop.f32.mrb[0].mxu0
        %1645 = vmatprep.mubr.bf16.mxu0 0
        %1646 = vmatmul.mubr.bf16.gmra.mrb[0].mxu0 %v1548
        %v1647 = vpop.f32.mrb[0].mxu0
        %v1648 = vadd.f32 0.0, %v1647
        %v1649 = vpop.f32.mrb[0].mxu0
        %v1650 = vpop.f32.mrb[0].mxu0
        %v1651 = vadd.f32 0.0, %v1650
        %v1652 = vpop.f32.mrb[0].mxu0
        %1653 = vdwg.mxu0
        %v1654 = vrcp.pop %v1510
        %v1655 = vrcp.pop %v1512
        %v1656 = vrcp.pop %v1514
        %v1657 = vrcp.pop %v1516
        %v1658 = vrcp.pop %v1518
        %v1659 = vrcp.pop %v1520
        %v1660 = vrcp.pop %v1522
        %v1661 = vrcp.pop %v1524
        %v1662 = vrcp.pop %v1526
        %v1663 = vrcp.pop %v1528
        %v1664 = vrcp.pop %v1530
        %v1665 = vrcp.pop %v1532
        %v1666 = vrcp.pop %v1534
        %v1667 = vrcp.pop %v1536
        %v1668 = vrcp.pop %v1538
        %v1669 = vrcp.pop %v1540
        %v1670 = vmul.f32 %v1592, %v1654
        %v1671 = vmul.f32 %v1595, %v1655
        %v1672 = vmul.f32 %v1600, %v1656
        %v1673 = vmul.f32 %v1603, %v1657
        %v1674 = vmul.f32 %v1608, %v1658
        %v1675 = vmul.f32 %v1611, %v1659
        %v1676 = vmul.f32 %v1616, %v1660
        %v1677 = vmul.f32 %v1619, %v1661
        %v1678 = vmul.f32 %v1624, %v1662
        %v1679 = vmul.f32 %v1627, %v1663
        %v1680 = vmul.f32 %v1632, %v1664
        %v1681 = vmul.f32 %v1635, %v1665
        %v1682 = vmul.f32 %v1640, %v1666
        %v1683 = vmul.f32 %v1643, %v1667
        %v1684 = vmul.f32 %v1648, %v1668
        %v1685 = vmul.f32 %v1651, %v1669
        %v1686 = vpack.c.bf16 %v1012, %v1008
        %v1687 = vpack.c.bf16 %v1022, %v1018
        %v1688 = vpack.c.bf16 %v1032, %v1028
        %v1689 = vpack.c.bf16 %v1042, %v1038
        %v1690 = vpack.c.bf16 %v1052, %v1048
        %v1691 = vpack.c.bf16 %v1062, %v1058
        %v1692 = vpack.c.bf16 %v1072, %v1068
        %v1693 = vpack.c.bf16 %v1082, %v1078
        %v1694 = vpack.c.bf16 %v1125, %v1121
        %v1695 = vpack.c.bf16 %v1135, %v1131
        %v1696 = vpack.c.bf16 %v1145, %v1141
        %v1697 = vpack.c.bf16 %v1155, %v1151
        %v1698 = vpack.c.bf16 %v1165, %v1161
        %v1699 = vpack.c.bf16 %v1175, %v1171
        %v1700 = vpack.c.bf16 %v1185, %v1181
        %v1701 = vpack.c.bf16 %v1195, %v1191
        %1702 = vmatprep.subr.bf16.mxu0 0
        %1703 = vmatpush1.bf16.xpose.msra.mxu0 %v1694
        %1704 = vmatprep.subr.bf16.mxu0 0
        %1705 = vmatpush1.bf16.xpose.msra.mxu0 %v1695
        %1706 = vmatprep.subr.bf16.mxu0 0
        %1707 = vmatpush1.bf16.xpose.msra.mxu0 %v1696
        %1708 = vmatprep.subr.bf16.mxu0 0
        %1709 = vmatpush1.bf16.xpose.msra.mxu0 %v1697
        %1710 = vmatprep.subr.bf16.mxu0 0
        %1711 = vmatpush1.bf16.xpose.msra.mxu0 %v1698
        %1712 = vmatprep.subr.bf16.mxu0 0
        %1713 = vmatpush1.bf16.xpose.msra.mxu0 %v1699
        %1714 = vmatprep.subr.bf16.mxu0 0
        %1715 = vmatpush1.bf16.xpose.msra.mxu0 %v1700
        %1716 = vmatprep.subr.bf16.mxu0 0
        %1717 = vmatpush1.bf16.xpose.msra.mxu0 %v1701
        %1718 = vmatprep.subr.bf16.mxu0 0
        %1719 = vmatpush1.bf16.xpose.msra.mxu0 0
        %1720 = vmatprep.subr.bf16.mxu0 0
        %1721 = vmatpush1.bf16.xpose.msra.mxu0 0
        %1722 = vmatprep.subr.bf16.mxu0 0
        %1723 = vmatpush1.bf16.xpose.msra.mxu0 0
        %1724 = vmatprep.subr.bf16.mxu0 0
        %1725 = vmatpush1.bf16.xpose.msra.mxu0 0
        %1726 = vmatprep.subr.bf16.mxu0 0
        %1727 = vmatpush1.bf16.xpose.msra.mxu0 0
        %1728 = vmatprep.subr.bf16.mxu0 0
        %1729 = vmatpush1.bf16.xpose.msra.mxu0 0
        %1730 = vmatprep.subr.bf16.mxu0 0
        %1731 = vmatpush1.bf16.xpose.msra.mxu0 0
        %1732 = vmatprep.subr.bf16.mxu0 0
        %1733 = vmatpush1.bf16.xpose.msra.mxu0 0
        %1734 = vmatprep.mubr.bf16.mxu0 0
        %1735 = vmatmul.mubr.bf16.gmra.mrb[0].mxu0 %v1686
        %v1736 = vpop.f32.mrb[0].mxu0
        %v1737 = vadd.f32 %v1330, %v1736
        %v1738 = vpop.f32.mrb[0].mxu0
        %v1739 = vpop.f32.mrb[0].mxu0
        %v1740 = vadd.f32 %v1330, %v1739
        %v1741 = vpop.f32.mrb[0].mxu0
        %1742 = vmatprep.mubr.bf16.mxu0 0
        %1743 = vmatmul.mubr.bf16.gmra.mrb[0].mxu0 %v1687
        %v1744 = vpop.f32.mrb[0].mxu0
        %v1745 = vadd.f32 %v1330, %v1744
        %v1746 = vpop.f32.mrb[0].mxu0
        %v1747 = vpop.f32.mrb[0].mxu0
        %v1748 = vadd.f32 %v1330, %v1747
        %v1749 = vpop.f32.mrb[0].mxu0
        %1750 = vmatprep.mubr.bf16.mxu0 0
        %1751 = vmatmul.mubr.bf16.gmra.mrb[0].mxu0 %v1688
        %v1752 = vpop.f32.mrb[0].mxu0
        %v1753 = vadd.f32 %v1330, %v1752
        %v1754 = vpop.f32.mrb[0].mxu0
        %v1755 = vpop.f32.mrb[0].mxu0
        %v1756 = vadd.f32 %v1330, %v1755
        %v1757 = vpop.f32.mrb[0].mxu0
        %1758 = vmatprep.mubr.bf16.mxu0 0
        %1759 = vmatmul.mubr.bf16.gmra.mrb[0].mxu0 %v1689
        %v1760 = vpop.f32.mrb[0].mxu0
        %v1761 = vadd.f32 %v1330, %v1760
        %v1762 = vpop.f32.mrb[0].mxu0
        %v1763 = vpop.f32.mrb[0].mxu0
        %v1764 = vadd.f32 %v1330, %v1763
        %v1765 = vpop.f32.mrb[0].mxu0
        %1766 = vmatprep.mubr.bf16.mxu0 0
        %1767 = vmatmul.mubr.bf16.gmra.mrb[0].mxu0 %v1690
        %v1768 = vpop.f32.mrb[0].mxu0
        %v1769 = vadd.f32 %v1330, %v1768
        %v1770 = vpop.f32.mrb[0].mxu0
        %v1771 = vpop.f32.mrb[0].mxu0
        %v1772 = vadd.f32 %v1330, %v1771
        %v1773 = vpop.f32.mrb[0].mxu0
        %1774 = vmatprep.mubr.bf16.mxu0 0
        %1775 = vmatmul.mubr.bf16.gmra.mrb[0].mxu0 %v1691
        %v1776 = vpop.f32.mrb[0].mxu0
        %v1777 = vadd.f32 %v1330, %v1776
        %v1778 = vpop.f32.mrb[0].mxu0
        %v1779 = vpop.f32.mrb[0].mxu0
        %v1780 = vadd.f32 %v1330, %v1779
        %v1781 = vpop.f32.mrb[0].mxu0
        %1782 = vmatprep.mubr.bf16.mxu0 0
        %1783 = vmatmul.mubr.bf16.gmra.mrb[0].mxu0 %v1692
        %v1784 = vpop.f32.mrb[0].mxu0
        %v1785 = vadd.f32 %v1330, %v1784
        %v1786 = vpop.f32.mrb[0].mxu0
        %v1787 = vpop.f32.mrb[0].mxu0
        %v1788 = vadd.f32 %v1330, %v1787
        %v1789 = vpop.f32.mrb[0].mxu0
        %1790 = vmatprep.mubr.bf16.mxu0 0
        %1791 = vmatmul.mubr.bf16.gmra.mrb[0].mxu0 %v1693
        %v1792 = vpop.f32.mrb[0].mxu0
        %v1793 = vadd.f32 %v1330, %v1792
        %v1794 = vpop.f32.mrb[0].mxu0
        %v1795 = vpop.f32.mrb[0].mxu0
        %v1796 = vadd.f32 %v1330, %v1795
        %v1797 = vpop.f32.mrb[0].mxu0
        %1798 = vdwg.mxu0
        %1799 = vmax.xlane.f32.xlu0 %v1737
        %v1800 = vpop.xlane.xlu0 %1799
        %1801 = vmax.xlane.f32.xlu0 %v1740
        %v1802 = vpop.xlane.xlu0 %1801
        %1803 = vmax.xlane.f32.xlu0 %v1745
        %v1804 = vpop.xlane.xlu0 %1803
        %1805 = vmax.xlane.f32.xlu0 %v1748
        %v1806 = vpop.xlane.xlu0 %1805
        %1807 = vmax.xlane.f32.xlu0 %v1753
        %v1808 = vpop.xlane.xlu0 %1807
        %1809 = vmax.xlane.f32.xlu0 %v1756
        %v1810 = vpop.xlane.xlu0 %1809
        %1811 = vmax.xlane.f32.xlu0 %v1761
        %v1812 = vpop.xlane.xlu0 %1811
        %1813 = vmax.xlane.f32.xlu0 %v1764
        %v1814 = vpop.xlane.xlu0 %1813
        %1815 = vmax.xlane.f32.xlu0 %v1769
        %v1816 = vpop.xlane.xlu0 %1815
        %1817 = vmax.xlane.f32.xlu0 %v1772
        %v1818 = vpop.xlane.xlu0 %1817
        %1819 = vmax.xlane.f32.xlu0 %v1777
        %v1820 = vpop.xlane.xlu0 %1819
        %1821 = vmax.xlane.f32.xlu0 %v1780
        %v1822 = vpop.xlane.xlu0 %1821
        %1823 = vmax.xlane.f32.xlu0 %v1785
        %v1824 = vpop.xlane.xlu0 %1823
        %1825 = vmax.xlane.f32.xlu0 %v1788
        %v1826 = vpop.xlane.xlu0 %1825
        %1827 = vmax.xlane.f32.xlu0 %v1793
        %v1828 = vpop.xlane.xlu0 %1827
        %1829 = vmax.xlane.f32.xlu0 %v1796
        %v1830 = vpop.xlane.xlu0 %1829
        %v1831 = vsub.f32 %v1737, %v1800
        %v1832 = vsub.f32 %v1740, %v1802
        %v1833 = vsub.f32 %v1745, %v1804
        %v1834 = vsub.f32 %v1748, %v1806
        %v1835 = vsub.f32 %v1753, %v1808
        %v1836 = vsub.f32 %v1756, %v1810
        %v1837 = vsub.f32 %v1761, %v1812
        %v1838 = vsub.f32 %v1764, %v1814
        %v1839 = vsub.f32 %v1769, %v1816
        %v1840 = vsub.f32 %v1772, %v1818
        %v1841 = vsub.f32 %v1777, %v1820
        %v1842 = vsub.f32 %v1780, %v1822
        %v1843 = vsub.f32 %v1785, %v1824
        %v1844 = vsub.f32 %v1788, %v1826
        %v1845 = vsub.f32 %v1793, %v1828
        %v1846 = vsub.f32 %v1796, %v1830
        %v1847 = vmul.f32 %v1831, 1.442695
        %v1848 = vpow.pop %v1847
        %v1849 = vmul.f32 %v1832, 1.442695
        %v1850 = vpow.pop %v1849
        %v1851 = vmul.f32 %v1833, 1.442695
        %v1852 = vpow.pop %v1851
        %v1853 = vmul.f32 %v1834, 1.442695
        %v1854 = vpow.pop %v1853
        %v1855 = vmul.f32 %v1835, 1.442695
        %v1856 = vpow.pop %v1855
        %v1857 = vmul.f32 %v1836, 1.442695
        %v1858 = vpow.pop %v1857
        %v1859 = vmul.f32 %v1837, 1.442695
        %v1860 = vpow.pop %v1859
        %v1861 = vmul.f32 %v1838, 1.442695
        %v1862 = vpow.pop %v1861
        %v1863 = vmul.f32 %v1839, 1.442695
        %v1864 = vpow.pop %v1863
        %v1865 = vmul.f32 %v1840, 1.442695
        %v1866 = vpow.pop %v1865
        %v1867 = vmul.f32 %v1841, 1.442695
        %v1868 = vpow.pop %v1867
        %v1869 = vmul.f32 %v1842, 1.442695
        %v1870 = vpow.pop %v1869
        %v1871 = vmul.f32 %v1843, 1.442695
        %v1872 = vpow.pop %v1871
        %v1873 = vmul.f32 %v1844, 1.442695
        %v1874 = vpow.pop %v1873
        %v1875 = vmul.f32 %v1845, 1.442695
        %v1876 = vpow.pop %v1875
        %v1877 = vmul.f32 %v1846, 1.442695
        %v1878 = vpow.pop %v1877
        %1879 = vadd.xlane.f32.xlu0 %v1848
        %v1880 = vpop.xlane.xlu0 %1879
        %1881 = vadd.xlane.f32.xlu0 %v1850
        %v1882 = vpop.xlane.xlu0 %1881
        %1883 = vadd.xlane.f32.xlu0 %v1852
        %v1884 = vpop.xlane.xlu0 %1883
        %1885 = vadd.xlane.f32.xlu0 %v1854
        %v1886 = vpop.xlane.xlu0 %1885
        %1887 = vadd.xlane.f32.xlu0 %v1856
        %v1888 = vpop.xlane.xlu0 %1887
        %1889 = vadd.xlane.f32.xlu0 %v1858
        %v1890 = vpop.xlane.xlu0 %1889
        %1891 = vadd.xlane.f32.xlu0 %v1860
        %v1892 = vpop.xlane.xlu0 %1891
        %1893 = vadd.xlane.f32.xlu0 %v1862
        %v1894 = vpop.xlane.xlu0 %1893
        %1895 = vadd.xlane.f32.xlu0 %v1864
        %v1896 = vpop.xlane.xlu0 %1895
        %1897 = vadd.xlane.f32.xlu0 %v1866
        %v1898 = vpop.xlane.xlu0 %1897
        %1899 = vadd.xlane.f32.xlu0 %v1868
        %v1900 = vpop.xlane.xlu0 %1899
        %1901 = vadd.xlane.f32.xlu0 %v1870
        %v1902 = vpop.xlane.xlu0 %1901
        %1903 = vadd.xlane.f32.xlu0 %v1872
        %v1904 = vpop.xlane.xlu0 %1903
        %1905 = vadd.xlane.f32.xlu0 %v1874
        %v1906 = vpop.xlane.xlu0 %1905
        %1907 = vadd.xlane.f32.xlu0 %v1876
        %v1908 = vpop.xlane.xlu0 %1907
        %1909 = vadd.xlane.f32.xlu0 %v1878
        %v1910 = vpop.xlane.xlu0 %1909
        %v1911 = vpack.c.bf16 %v1850, %v1848
        %v1912 = vpack.c.bf16 %v1854, %v1852
        %v1913 = vpack.c.bf16 %v1858, %v1856
        %v1914 = vpack.c.bf16 %v1862, %v1860
        %v1915 = vpack.c.bf16 %v1866, %v1864
        %v1916 = vpack.c.bf16 %v1870, %v1868
        %v1917 = vpack.c.bf16 %v1874, %v1872
        %v1918 = vpack.c.bf16 %v1878, %v1876
        %v1919 = vpack.c.bf16 %v1238, %v1234
        %v1920 = vpack.c.bf16 %v1248, %v1244
        %v1921 = vpack.c.bf16 %v1258, %v1254
        %v1922 = vpack.c.bf16 %v1268, %v1264
        %v1923 = vpack.c.bf16 %v1278, %v1274
        %v1924 = vpack.c.bf16 %v1288, %v1284
        %v1925 = vpack.c.bf16 %v1298, %v1294
        %v1926 = vpack.c.bf16 %v1308, %v1304
        %1927 = vmatprep.subr.bf16.mxu0 0
        %1928 = vmatpush1.bf16.msra.mxu0 %v1919
        %1929 = vmatprep.subr.bf16.mxu0 0
        %1930 = vmatpush1.bf16.msra.mxu0 %v1920
        %1931 = vmatprep.subr.bf16.mxu0 0
        %1932 = vmatpush1.bf16.msra.mxu0 %v1921
        %1933 = vmatprep.subr.bf16.mxu0 0
        %1934 = vmatpush1.bf16.msra.mxu0 %v1922
        %1935 = vmatprep.subr.bf16.mxu0 0
        %1936 = vmatpush1.bf16.msra.mxu0 %v1923
        %1937 = vmatprep.subr.bf16.mxu0 0
        %1938 = vmatpush1.bf16.msra.mxu0 %v1924
        %1939 = vmatprep.subr.bf16.mxu0 0
        %1940 = vmatpush1.bf16.msra.mxu0 %v1925
        %1941 = vmatprep.subr.bf16.mxu0 0
        %1942 = vmatpush1.bf16.msra.mxu0 %v1926
        %1943 = vmatprep.subr.bf16.mxu0 0
        %1944 = vmatpush1.bf16.msra.mxu0 0
        %1945 = vmatprep.subr.bf16.mxu0 0
        %1946 = vmatpush1.bf16.msra.mxu0 0
        %1947 = vmatprep.subr.bf16.mxu0 0
        %1948 = vmatpush1.bf16.msra.mxu0 0
        %1949 = vmatprep.subr.bf16.mxu0 0
        %1950 = vmatpush1.bf16.msra.mxu0 0
        %1951 = vmatprep.subr.bf16.mxu0 0
        %1952 = vmatpush1.bf16.msra.mxu0 0
        %1953 = vmatprep.subr.bf16.mxu0 0
        %1954 = vmatpush1.bf16.msra.mxu0 0
        %1955 = vmatprep.subr.bf16.mxu0 0
        %1956 = vmatpush1.bf16.msra.mxu0 0
        %1957 = vmatprep.subr.bf16.mxu0 0
        %1958 = vmatpush1.bf16.msra.mxu0 0
        %1959 = vmatprep.mubr.bf16.mxu0 0
        %1960 = vmatmul.mubr.bf16.gmra.mrb[0].mxu0 %v1911
        %v1961 = vpop.f32.mrb[0].mxu0
        %v1962 = vadd.f32 0.0, %v1961
        %v1963 = vpop.f32.mrb[0].mxu0
        %v1964 = vpop.f32.mrb[0].mxu0
        %v1965 = vadd.f32 0.0, %v1964
        %v1966 = vpop.f32.mrb[0].mxu0
        %1967 = vmatprep.mubr.bf16.mxu0 0
        %1968 = vmatmul.mubr.bf16.gmra.mrb[0].mxu0 %v1912
        %v1969 = vpop.f32.mrb[0].mxu0
        %v1970 = vadd.f32 0.0, %v1969
        %v1971 = vpop.f32.mrb[0].mxu0
        %v1972 = vpop.f32.mrb[0].mxu0
        %v1973 = vadd.f32 0.0, %v1972
        %v1974 = vpop.f32.mrb[0].mxu0
        %1975 = vmatprep.mubr.bf16.mxu0 0
        %1976 = vmatmul.mubr.bf16.gmra.mrb[0].mxu0 %v1913
        %v1977 = vpop.f32.mrb[0].mxu0
        %v1978 = vadd.f32 0.0, %v1977
        %v1979 = vpop.f32.mrb[0].mxu0
        %v1980 = vpop.f32.mrb[0].mxu0
        %v1981 = vadd.f32 0.0, %v1980
        %v1982 = vpop.f32.mrb[0].mxu0
        %1983 = vmatprep.mubr.bf16.mxu0 0
        %1984 = vmatmul.mubr.bf16.gmra.mrb[0].mxu0 %v1914
        %v1985 = vpop.f32.mrb[0].mxu0
        %v1986 = vadd.f32 0.0, %v1985
        %v1987 = vpop.f32.mrb[0].mxu0
        %v1988 = vpop.f32.mrb[0].mxu0
        %v1989 = vadd.f32 0.0, %v1988
        %v1990 = vpop.f32.mrb[0].mxu0
        %1991 = vmatprep.mubr.bf16.mxu0 0
        %1992 = vmatmul.mubr.bf16.gmra.mrb[0].mxu0 %v1915
        %v1993 = vpop.f32.mrb[0].mxu0
        %v1994 = vadd.f32 0.0, %v1993
        %v1995 = vpop.f32.mrb[0].mxu0
        %v1996 = vpop.f32.mrb[0].mxu0
        %v1997 = vadd.f32 0.0, %v1996
        %v1998 = vpop.f32.mrb[0].mxu0
        %1999 = vmatprep.mubr.bf16.mxu0 0
        %2000 = vmatmul.mubr.bf16.gmra.mrb[0].mxu0 %v1916
        %v2001 = vpop.f32.mrb[0].mxu0
        %v2002 = vadd.f32 0.0, %v2001
        %v2003 = vpop.f32.mrb[0].mxu0
        %v2004 = vpop.f32.mrb[0].mxu0
        %v2005 = vadd.f32 0.0, %v2004
        %v2006 = vpop.f32.mrb[0].mxu0
        %2007 = vmatprep.mubr.bf16.mxu0 0
        %2008 = vmatmul.mubr.bf16.gmra.mrb[0].mxu0 %v1917
        %v2009 = vpop.f32.mrb[0].mxu0
        %v2010 = vadd.f32 0.0, %v2009
        %v2011 = vpop.f32.mrb[0].mxu0
        %v2012 = vpop.f32.mrb[0].mxu0
        %v2013 = vadd.f32 0.0, %v2012
        %v2014 = vpop.f32.mrb[0].mxu0
        %2015 = vmatprep.mubr.bf16.mxu0 0
        %2016 = vmatmul.mubr.bf16.gmra.mrb[0].mxu0 %v1918
        %v2017 = vpop.f32.mrb[0].mxu0
        %v2018 = vadd.f32 0.0, %v2017
        %v2019 = vpop.f32.mrb[0].mxu0
        %v2020 = vpop.f32.mrb[0].mxu0
        %v2021 = vadd.f32 0.0, %v2020
        %v2022 = vpop.f32.mrb[0].mxu0
        %2023 = vdwg.mxu0
        %v2024 = vrcp.pop %v1880
        %v2025 = vrcp.pop %v1882
        %v2026 = vrcp.pop %v1884
        %v2027 = vrcp.pop %v1886
        %v2028 = vrcp.pop %v1888
        %v2029 = vrcp.pop %v1890
        %v2030 = vrcp.pop %v1892
        %v2031 = vrcp.pop %v1894
        %v2032 = vrcp.pop %v1896
        %v2033 = vrcp.pop %v1898
        %v2034 = vrcp.pop %v1900
        %v2035 = vrcp.pop %v1902
        %v2036 = vrcp.pop %v1904
        %v2037 = vrcp.pop %v1906
        %v2038 = vrcp.pop %v1908
        %v2039 = vrcp.pop %v1910
        %v2040 = vmul.f32 %v1962, %v2024
        %v2041 = vmul.f32 %v1965, %v2025
        %v2042 = vmul.f32 %v1970, %v2026
        %v2043 = vmul.f32 %v1973, %v2027
        %v2044 = vmul.f32 %v1978, %v2028
        %v2045 = vmul.f32 %v1981, %v2029
        %v2046 = vmul.f32 %v1986, %v2030
        %v2047 = vmul.f32 %v1989, %v2031
        %v2048 = vmul.f32 %v1994, %v2032
        %v2049 = vmul.f32 %v1997, %v2033
        %v2050 = vmul.f32 %v2002, %v2034
        %v2051 = vmul.f32 %v2005, %v2035
        %v2052 = vmul.f32 %v2010, %v2036
        %v2053 = vmul.f32 %v2013, %v2037
        %v2054 = vmul.f32 %v2018, %v2038
        %v2055 = vmul.f32 %v2021, %v2039
        %2056 = vst [vmem:[%s255] sm:$0xff] %v1670
        %2057 = vst [vmem:[%s255 + $0x8] sm:$0xff] %v2040
        %2058 = vst [vmem:[%s255 + $0x10] sm:$0xff] %v1671
        %2059 = vst [vmem:[%s255 + $0x18] sm:$0xff] %v2041
        %2060 = vst [vmem:[%s255 + $0x20] sm:$0xff] %v1672
        %2061 = vst [vmem:[%s255 + $0x28] sm:$0xff] %v2042
        %2062 = vst [vmem:[%s255 + $0x30] sm:$0xff] %v1673
        %2063 = vst [vmem:[%s255 + $0x38] sm:$0xff] %v2043
        %2064 = vst [vmem:[%s255 + $0x40] sm:$0xff] %v1674
        %2065 = vst [vmem:[%s255 + $0x48] sm:$0xff] %v2044
        %2066 = vst [vmem:[%s255 + $0x50] sm:$0xff] %v1675
        %2067 = vst [vmem:[%s255 + $0x58] sm:$0xff] %v2045
        %2068 = vst [vmem:[%s255 + $0x60] sm:$0xff] %v1676
        %2069 = vst [vmem:[%s255 + $0x68] sm:$0xff] %v2046
        %2070 = vst [vmem:[%s255 + $0x70] sm:$0xff] %v1677
        %2071 = vst [vmem:[%s255 + $0x78] sm:$0xff] %v2047
        %2072 = vst [vmem:[%s255 + $0x80] sm:$0xff] %v1678
        %2073 = vst [vmem:[%s255 + $0x88] sm:$0xff] %v2048
        %2074 = vst [vmem:[%s255 + $0x90] sm:$0xff] %v1679
        %2075 = vst [vmem:[%s255 + $0x98] sm:$0xff] %v2049
        %2076 = vst [vmem:[%s255 + $0xa0] sm:$0xff] %v1680
        %2077 = vst [vmem:[%s255 + $0xa8] sm:$0xff] %v2050
        %2078 = vst [vmem:[%s255 + $0xb0] sm:$0xff] %v1681
        %2079 = vst [vmem:[%s255 + $0xb8] sm:$0xff] %v2051
        %2080 = vst [vmem:[%s255 + $0xc0] sm:$0xff] %v1682
        %2081 = vst [vmem:[%s255 + $0xc8] sm:$0xff] %v2052
        %2082 = vst [vmem:[%s255 + $0xd0] sm:$0xff] %v1683
        %2083 = vst [vmem:[%s255 + $0xd8] sm:$0xff] %v2053
        %2084 = vst [vmem:[%s255 + $0xe0] sm:$0xff] %v1684
        %2085 = vst [vmem:[%s255 + $0xe8] sm:$0xff] %v2054
        %2086 = vst [vmem:[%s255 + $0xf0] sm:$0xff] %v1685
        %2087 = vst [vmem:[%s255 + $0xf8] sm:$0xff] %v2055
        %s2088 = sand.u32 %s138, 1
        %s2089 = scalar_lea.sflag [#allocation4], %s2088
        %s2090 = sand.u32 %s138, 1
        %s2091 = smul.addr %s2090, 256
        %s2092 = scalar_lea.vmem [#allocation7], %s2091
        // Predicated region
        $region45: #{tpu_custom_call.1} parent=35 // pred_check
          %p2093 = pneg %p148
        $region46: #{tpu_custom_call.1} parent=35 // pred_check_branch
          %2095 = sbr.rel (%p2093) target = $region48
        $region47: #{tpu_custom_call.1} parent=35 // pred_region
          %s2096 = smul.u32 2, %s27
          %s2098 = ssub.s32 4096, 4096
          %2099 = vsyncadd %s2089, %s2098
          %s2100 = smul.addr %s26, 32
          %s2101 = sadd.s32 %s2096, %s2100
          %s2102 = smul.addr %s2101, 128
          %s2103 = scalar_lea.hbm %s4, %s2102
          %s2104 = sshll.u32 %s2092, 4
          %s2105 = int_to_ptr.vmem [resolvable:$true] %s2104
          %2110 = dma.vmem_to_hbm [thread:$0]  %s2105, 4096, %s2103, %s2089, 256, 256, 16
        $region48: #{tpu_custom_call.1} parent=35 // pred_fallthru
          _
      $region36: #{tpu_custom_call.1} parent=5 // pred_fallthru
        _
      %p2111 = scmp.le.s32.totalorder 2, %s17
      // Predicated region
      $region49: #{tpu_custom_call.1} parent=5 // pred_check
        %p2112 = pneg %p2111
      $region50: #{tpu_custom_call.1} parent=5 // pred_check_branch
        %2114 = sbr.rel (%p2112) target = $region52
      $region51: #{tpu_custom_call.1} parent=5 // pred_region
        %s2115 = ssub.s32 %s17, 2
        // Predicated region
        $region53: #{tpu_custom_call.1} parent=51 // pred_check
          %p2116 = pneg %p154
        $region54: #{tpu_custom_call.1} parent=51 // pred_check_branch
          %2118 = sbr.rel (%p2116) target = $region56
        $region55: #{tpu_custom_call.1} parent=51 // pred_region
          %s2119 = sand.u32 %s139, 1
          %s2120 = scalar_lea.sflag [#allocation4], %s2119
          %s2121 = sand.u32 %s139, 1
          %s2122 = smul.addr %s2121, 256
          %s2123 = scalar_lea.vmem [#allocation7], %s2122
          %2124 = dma.done %s2120, 4096
        $region56: #{tpu_custom_call.1} parent=51 // pred_fallthru
          _
      $region52: #{tpu_custom_call.1} parent=5 // pred_fallthru
        _
    $region6: #{tpu_custom_call.1} parent=1 // loop_footer
      %s21 = sadd.s32 1, %s17
    $region7: #{tpu_custom_call.1} parent=1 // loop_footer_branch
      %16 = sbr.rel target = $region3
    $region8: #{tpu_custom_call.1} parent=1 // loop_exit
      _
    %2125 = vsyncpa [#allocation3], 1
    %s2126 = scalar_lea.sflag [#allocation3], 1
    %2127 = vsyncpa %s2126, 1
    %2128 = vsyncpa [#allocation6], 1
    %2129 = vsyncpa [#allocation4], 1
    %s2130 = scalar_lea.sflag [#allocation4], 1
    %2131 = vsyncpa %s2130, 1

</llo_original>
